<compile_context>
chip_gen: v7x
topology: tpu7x:2x2x1
jax: 0.10.0
libtpu: 0.0.40
codegen_flags: <defaults>
</compile_context>

<pallas_src>
import functools
import math

import jax
import jax.numpy as jnp
from jax.experimental import pallas as pl
from jax.experimental.pallas import tpu as pltpu

LN_EPS = 1e-5                      # PyTorch nn.LayerNorm default
VMEM_LIMIT_BYTES = 48 * 1024 * 1024


# --------------------------------------------------------------------------------------
# In-kernel math helpers (all f32)
# --------------------------------------------------------------------------------------
def _erf(x):
    # Abramowitz & Stegun 7.1.26 polynomial, |err| <= 1.5e-7, in f32 so the exact
    # (erf-based) nn.GELU semantics lower cleanly on Mosaic. exp() goes to the EUP.
    a1, a2, a3, a4, a5 = 0.254829592, -0.284496736, 1.421413741, -1.453152027, 1.061405429
    p = 0.3275911
    s = jnp.sign(x)
    z = jnp.abs(x)
    t = 1.0 / (1.0 + p * z)
    poly = t * (a1 + t * (a2 + t * (a3 + t * (a4 + t * a5))))
    return s * (1.0 - poly * jnp.exp(-z * z))


def _gelu_exact(x):
    return 0.5 * x * (1.0 + _erf(x * (1.0 / math.sqrt(2.0))))


def _layernorm(x, g, b):
    mu = jnp.mean(x, axis=-1, keepdims=True)
    var = jnp.mean((x - mu) ** 2, axis=-1, keepdims=True)   # biased, like PyTorch
    return (x - mu) * jax.lax.rsqrt(var + LN_EPS) * g + b


# --------------------------------------------------------------------------------------
# Kernel 1: Residual(PreNorm(Attention)) for one batch element per grid step
# --------------------------------------------------------------------------------------
def attention_kernel(x_ref, g_ref, b_ref, wqkv_ref, wo_ref, bo_ref, o_ref, *,
                     heads, compute_dtype, approx_recip):
    x = x_ref[0]                                  # (n, dim) f32
    n, dim = x.shape
    d = dim // heads
    f32 = jnp.float32

    # PreNorm in f32, one cast at the MXU boundary.
    h = _layernorm(x, g_ref[...], b_ref[...]).astype(compute_dtype)

    # ONE fused, lane-dense QKV projection (Q columns were pre-scaled by dim**-0.5).
    qkv = jnp.dot(h, wqkv_ref[...], preferred_element_type=compute_dtype)   # (n, 3*dim)

    # Head split: static lane slices + leading-axis stack -> (heads, n, d).
    def heads_of(base):
        return jnp.stack(
            [qkv[:, base + hh * d: base + (hh + 1) * d] for hh in range(heads)], axis=0)

    q = heads_of(0)
    k = heads_of(dim)
    v = heads_of(2 * dim)

    # Scores + softmax (f32 reductions; heads is the batched matmul axis).
    dots = jnp.einsum('hid,hjd->hij', q, k, preferred_element_type=f32)
    dots = dots - jnp.max(dots, axis=-1, keepdims=True)
    e = jnp.exp(dots)
    denom = jnp.sum(e, axis=-1, keepdims=True)
    if approx_recip:
        attn = e * pl.reciprocal(denom, approx=True)     # EUP slot
    else:
        attn = e / denom                                  # exact path for the f32 check

    # attn @ V -> (heads, n, d); merge heads to (n, heads*d) via lane concat and do ONE
    # dense output projection with contraction depth K = dim.
    out = jnp.einsum('hij,hjd->hid', attn.astype(compute_dtype), v,
                     preferred_element_type=compute_dtype)
    out2d = jnp.concatenate([out[hh] for hh in range(heads)], axis=-1)      # (n, dim)
    y = jnp.dot(out2d, wo_ref[...], preferred_element_type=f32) + bo_ref[...]

    o_ref[0] = (x + y).astype(o_ref.dtype)                # residual


def attention_block(x, ops, *, heads, compute_dtype):
    b, n, dim = x.shape
    params = [ops["ln1_g"], ops["ln1_b"], ops["wqkv"], ops["wo"], ops["bo"]]

    def const_spec(a):
        return pl.BlockSpec(a.shape, lambda i: (0,) * a.ndim)

    return pl.pallas_call(
        functools.partial(attention_kernel,
                          heads=heads,
                          compute_dtype=compute_dtype,
                          approx_recip=(compute_dtype != jnp.float32)),
        out_shape=jax.ShapeDtypeStruct((b, n, dim), x.dtype),
        grid=(b,),
        in_specs=[pl.BlockSpec((1, n, dim), lambda i: (i, 0, 0))]
                 + [const_spec(a) for a in params],
        out_specs=pl.BlockSpec((1, n, dim), lambda i: (i, 0, 0)),
        compiler_params=pltpu.CompilerParams(
            dimension_semantics=("parallel",),
            vmem_limit_bytes=VMEM_LIMIT_BYTES),
    )(x, *params)


# --------------------------------------------------------------------------------------
# Kernel 2: Residual(PreNorm(FeedForward)), row-tiled + mlp_dim-chunked reduction
# --------------------------------------------------------------------------------------
def ffn_kernel(x_ref, g_ref, b_ref, w1_ref, b1_ref, w2_ref, b2_ref, o_ref,
               acc_ref, hnorm_ref, *, compute_dtype):
    c = pl.program_id(1)
    nc = pl.num_programs(1)

    @pl.when(c == 0)
    def _():
        x = x_ref[...]                                    # (tile_r, dim) f32
        # Fold the residual and the final bias into the accumulator init.
        acc_ref[...] = x + b2_ref[...]
        # Hoist LayerNorm (and the compute-dtype cast) out of the mlp-chunk loop.
        hnorm_ref[...] = _layernorm(x, g_ref[...], b_ref[...]).astype(compute_dtype)

    h = hnorm_ref[...]
    m = jnp.dot(h, w1_ref[...], preferred_element_type=jnp.float32) + b1_ref[...]
    m = _gelu_exact(m)                                    # f32, exact erf GELU
    acc_ref[...] += jnp.dot(m.astype(compute_dtype), w2_ref[...],
                            preferred_element_type=jnp.float32)

    @pl.when(c == nc - 1)
    def _():
        o_ref[...] = acc_ref[...].astype(o_ref.dtype)


def _pick_row_tile(rows, target=512):
    if rows <= target:
        return rows
    for t in range(target, 7, -8):
        if rows % t == 0:
            return t
    return rows


def _pick_mlp_chunk(mlp_dim, target=512):
    if mlp_dim <= target or mlp_dim % 128 != 0:
        return mlp_dim
    for c in range(target, 127, -128):
        if mlp_dim % c == 0:
            return c
    return mlp_dim


def ffn_block(x2d, ops, *, compute_dtype, row_tile=None, mlp_chunk=None):
    rows, dim = x2d.shape
    mlp = ops["w1c"].shape[1]
    tile_r = row_tile if row_tile is not None else _pick_row_tile(rows)
    chunk = mlp_chunk if mlp_chunk is not None else _pick_mlp_chunk(mlp)
    assert rows % tile_r == 0, (rows, tile_r)
    assert mlp % chunk == 0 and (chunk == mlp or chunk % 128 == 0), (mlp, chunk)
    grid = (rows // tile_r, mlp // chunk)

    in_specs = [
        pl.BlockSpec((tile_r, dim), lambda r, c: (r, 0)),   # x rows
        pl.BlockSpec((1, dim),      lambda r, c: (0, 0)),   # ln2_g
        pl.BlockSpec((1, dim),      lambda r, c: (0, 0)),   # ln2_b
        pl.BlockSpec((dim, chunk),  lambda r, c: (0, c)),   # w1 chunk (streamed)
        pl.BlockSpec((1, chunk),    lambda r, c: (0, c)),   # b1 chunk
        pl.BlockSpec((chunk, dim),  lambda r, c: (c, 0)),   # w2 chunk (streamed)
        pl.BlockSpec((1, dim),      lambda r, c: (0, 0)),   # b2
    ]
    return pl.pallas_call(
        functools.partial(ffn_kernel, compute_dtype=compute_dtype),
        out_shape=jax.ShapeDtypeStruct((rows, dim), x2d.dtype),
        grid=grid,
        in_specs=in_specs,
        out_specs=pl.BlockSpec((tile_r, dim), lambda r, c: (r, 0)),
        scratch_shapes=[pltpu.VMEM((tile_r, dim), jnp.float32),     # f32 accumulator
                        pltpu.VMEM((tile_r, dim), compute_dtype)],  # hoisted LN(x)
        compiler_params=pltpu.CompilerParams(
            dimension_semantics=("parallel", "arbitrary"),
            vmem_limit_bytes=VMEM_LIMIT_BYTES),
    )(x2d, ops["ln2_g"], ops["ln2_b"], ops["w1c"], ops["b1"], ops["w2c"], ops["b2"])


# --------------------------------------------------------------------------------------
# Parameter prep (plain JAX, outside kernels): fold softmax scale into the Q columns of
# the fused QKV weight and cast the big matmul weights to the compute dtype.
# --------------------------------------------------------------------------------------
def prepare_layer_operands(p, heads, compute_dtype):
    dim = p["wqkv"].shape[0]
    assert dim % heads == 0
    scale = dim ** (-0.5)            # matches `self.scale = dim ** -0.5`
    wqkv = p["wqkv"]
    wqkv_scaled = jnp.concatenate([wqkv[:, :dim] * scale, wqkv[:, dim:]], axis=1)

    cd = compute_dtype
    return dict(
        ln1_g=p["ln1_g"], ln1_b=p["ln1_b"],
        wqkv=wqkv_scaled.astype(cd),          # (dim, 3*dim), Q columns pre-scaled
        wo=p["wo"].astype(cd),                # (dim, dim)
        bo=p["bo"],
        ln2_g=p["ln2_g"], ln2_b=p["ln2_b"],
        w1c=p["w1"].astype(cd), b1=p["b1"], w2c=p["w2"].astype(cd), b2=p["b2"],
    )


def transformer_forward(x, layer_params, heads, *, compute_dtype=jnp.bfloat16,
                        row_tile=None, mlp_chunk=None):
    b, n, dim = x.shape
    for p in layer_params:
        ops = prepare_layer_operands(p, heads, compute_dtype)
        x = attention_block(x, ops, heads=heads, compute_dtype=compute_dtype)
        y = ffn_block(x.reshape(b * n, dim), ops, compute_dtype=compute_dtype,
                      row_tile=row_tile, mlp_chunk=mlp_chunk)
        x = y.reshape(b, n, dim)
    return x


def init_transformer_params(key, dim, depth, heads, mlp_dim):
    """Deterministic synthetic parameters, shapes matching the PyTorch module.
    Linear weights are stored as (in, out) so the math is x @ W."""
    def lin(k, fan_in, fan_out):
        return (jax.random.normal(k, (fan_in, fan_out), jnp.float32)
                / jnp.sqrt(jnp.float32(fan_in)))

    layers = []
    for _ in range(depth):
        key, k0, k1, k2, k3, k4 = jax.random.split(key, 6)
        layers.append(dict(
            ln1_g=jnp.ones((1, dim), jnp.float32),
            ln1_b=jnp.zeros((1, dim), jnp.float32),
            wqkv=lin(k0, dim, 3 * dim),                               # to_qkv (bias=False)
            wo=lin(k1, dim, dim),                                     # to_out weight
            bo=0.01 * jax.random.normal(k2, (1, dim), jnp.float32),   # to_out bias
            ln2_g=jnp.ones((1, dim), jnp.float32),
            ln2_b=jnp.zeros((1, dim), jnp.float32),
            w1=lin(k3, dim, mlp_dim),
            b1=jnp.zeros((1, mlp_dim), jnp.float32),
            w2=lin(k4, mlp_dim, dim),
            b2=jnp.zeros((1, dim), jnp.float32),
        ))
    return layers


# ----- pure-JAX reference (mirrors the PyTorch forward) for verification -----
def _ref_ln(x, g, b):
    mu = jnp.mean(x, axis=-1, keepdims=True)
    var = jnp.mean((x - mu) ** 2, axis=-1, keepdims=True)
    return (x - mu) / jnp.sqrt(var + LN_EPS) * g + b


def reference_forward(x, layer_params, heads):
    for p in layer_params:
        b, n, dim = x.shape
        d = dim // heads
        h = _ref_ln(x, p["ln1_g"][0], p["ln1_b"][0])
        qkv = h @ p["wqkv"]
        q, k, v = qkv[..., :dim], qkv[..., dim:2 * dim], qkv[..., 2 * dim:]
        q = q.reshape(b, n, heads, d).transpose(0, 2, 1, 3)
        k = k.reshape(b, n, heads, d).transpose(0, 2, 1, 3)
        v = v.reshape(b, n, heads, d).transpose(0, 2, 1, 3)
        dots = jnp.einsum('bhid,bhjd->bhij', q, k) * dim ** (-0.5)
        attn = jax.nn.softmax(dots, axis=-1)
        out = jnp.einsum('bhij,bhjd->bhid', attn, v)
        out = out.transpose(0, 2, 1, 3).reshape(b, n, dim)
        out = out @ p["wo"] + p["bo"][0]
        x = x + out
        h2 = _ref_ln(x, p["ln2_g"][0], p["ln2_b"][0])
        m = jax.nn.gelu(h2 @ p["w1"] + p["b1"][0], approximate=False)
        m = m @ p["w2"] + p["b2"][0]
        x = x + m
    return x


if __name__ == "__main__":
    # Small deterministic shapes; MLP_DIM=256 with mlp_chunk=128 exercises the
    # multi-chunk accumulator / gated-store path, row_tile=8 exercises row tiling.
    B, N, DIM, HEADS, MLP_DIM, DEPTH = 2, 8, 32, 4, 256, 2

    key = jax.random.PRNGKey(0)
    kx, kp = jax.random.split(key)
    x = jax.random.normal(kx, (B, N, DIM), jnp.float32)
    layer_params = init_transformer_params(kp, DIM, DEPTH, HEADS, MLP_DIM)

    ref = reference_forward(x, layer_params, HEADS)

    # 1) exact-precision path (f32 matmuls): tight check against the PyTorch-equivalent ref.
    out_f32 = transformer_forward(x, layer_params, HEADS,
                                  compute_dtype=jnp.float32,
                                  row_tile=8, mlp_chunk=128)
    out_f32 = jax.block_until_ready(out_f32)
    assert out_f32.shape == (B, N, DIM), out_f32.shape
    err32 = float(jnp.max(jnp.abs(out_f32 - ref)))
    assert jnp.allclose(out_f32, ref, atol=1e-4, rtol=1e-4), f"f32 max abs err = {err32}"

    # 2) performance path (bf16 MXU operands, f32 accumulation): loose sanity check.
    out_bf16 = transformer_forward(x, layer_params, HEADS,
                                   compute_dtype=jnp.bfloat16,
                                   row_tile=8, mlp_chunk=128)
    out_bf16 = jax.block_until_ready(out_bf16)
    assert bool(jnp.all(jnp.isfinite(out_bf16)))
    err16 = float(jnp.max(jnp.abs(out_bf16 - ref)))
    assert jnp.allclose(out_bf16, ref, atol=2.5e-1, rtol=5e-2), f"bf16 max abs err = {err16}"

    print("KERNEL_OK")
</pallas_src>

<mosaic_0001>
module attributes {stable_mosaic.version = 11 : i64} {
  func.func @attention_kernel(%arg0: i32, %arg1: memref<1x8x32xf32, #tpu.memory_space<vmem>>, %arg2: memref<1x32xf32, #tpu.memory_space<vmem>>, %arg3: memref<1x32xf32, #tpu.memory_space<vmem>>, %arg4: memref<32x96xf32, #tpu.memory_space<vmem>>, %arg5: memref<32x32xf32, #tpu.memory_space<vmem>>, %arg6: memref<1x32xf32, #tpu.memory_space<vmem>>, %arg7: memref<1x8x32xf32, #tpu.memory_space<vmem>>) attributes {dimension_semantics = [#tpu.dimension_semantics<parallel>], iteration_bounds = array<i64: 2>, scalar_prefetch = 0 : i64, scratch_operands = 0 : i64, tpu.core_type = #tpu.core_type<tc>, window_params = [{transform_indices = @transform_0, window_bounds = array<i64: 1, 8, 32>}, {pipeline_mode = #tpu.pipeline_mode<synchronous>, transform_indices = @transform_1, window_bounds = array<i64: 1, 32>}, {pipeline_mode = #tpu.pipeline_mode<synchronous>, transform_indices = @transform_2, window_bounds = array<i64: 1, 32>}, {pipeline_mode = #tpu.pipeline_mode<synchronous>, transform_indices = @transform_3, window_bounds = array<i64: 32, 96>}, {pipeline_mode = #tpu.pipeline_mode<synchronous>, transform_indices = @transform_4, window_bounds = array<i64: 32, 32>}, {pipeline_mode = #tpu.pipeline_mode<synchronous>, transform_indices = @transform_5, window_bounds = array<i64: 1, 32>}, {transform_indices = @transform_6, window_bounds = array<i64: 1, 8, 32>}]} {
    %c0 = arith.constant 0 : index
    %c0_0 = arith.constant 0 : index
    %c0_1 = arith.constant 0 : index
    %0 = vector.load %arg1[%c0, %c0_0, %c0_1] : memref<1x8x32xf32, #tpu.memory_space<vmem>>, vector<1x8x32xf32>
    %1 = vector.shape_cast %0 : vector<1x8x32xf32> to vector<8x32xf32>
    %c0_2 = arith.constant 0 : index
    %c0_3 = arith.constant 0 : index
    %2 = vector.load %arg2[%c0_2, %c0_3] : memref<1x32xf32, #tpu.memory_space<vmem>>, vector<1x32xf32>
    %c0_4 = arith.constant 0 : index
    %c0_5 = arith.constant 0 : index
    %3 = vector.load %arg3[%c0_4, %c0_5] : memref<1x32xf32, #tpu.memory_space<vmem>>, vector<1x32xf32>
    %cst = arith.constant dense<0.000000e+00> : vector<8xf32>
    %4 = vector.multi_reduction <add>, %1, %cst [1] : vector<8x32xf32> to vector<8xf32>
    %5 = vector.shape_cast %4 : vector<8xf32> to vector<8x1xf32>
    %cst_6 = arith.constant 3.200000e+01 : f32
    %6 = vector.broadcast %cst_6 : f32 to vector<8x1xf32>
    %7 = arith.divf %5, %6 : vector<8x1xf32>
    %8 = vector.broadcast %7 : vector<8x1xf32> to vector<8x32xf32>
    %9 = arith.subf %1, %8 : vector<8x32xf32>
    %10 = arith.mulf %9, %9 : vector<8x32xf32>
    %cst_7 = arith.constant dense<0.000000e+00> : vector<8xf32>
    %11 = vector.multi_reduction <add>, %10, %cst_7 [1] : vector<8x32xf32> to vector<8xf32>
    %12 = vector.shape_cast %11 : vector<8xf32> to vector<8x1xf32>
    %cst_8 = arith.constant 3.200000e+01 : f32
    %13 = vector.broadcast %cst_8 : f32 to vector<8x1xf32>
    %14 = arith.divf %12, %13 : vector<8x1xf32>
    %15 = vector.broadcast %7 : vector<8x1xf32> to vector<8x32xf32>
    %16 = arith.subf %1, %15 : vector<8x32xf32>
    %cst_9 = arith.constant 9.99999974E-6 : f32
    %17 = vector.broadcast %cst_9 : f32 to vector<8x1xf32>
    %18 = arith.addf %14, %17 : vector<8x1xf32>
    %19 = math.rsqrt %18 : vector<8x1xf32>
    %20 = vector.broadcast %19 : vector<8x1xf32> to vector<8x32xf32>
    %21 = arith.mulf %16, %20 : vector<8x32xf32>
    %22 = vector.broadcast %2 : vector<1x32xf32> to vector<8x32xf32>
    %23 = arith.mulf %21, %22 : vector<8x32xf32>
    %24 = vector.broadcast %3 : vector<1x32xf32> to vector<8x32xf32>
    %25 = arith.addf %23, %24 : vector<8x32xf32>
    %c0_10 = arith.constant 0 : index
    %c0_11 = arith.constant 0 : index
    %26 = vector.load %arg4[%c0_10, %c0_11] : memref<32x96xf32, #tpu.memory_space<vmem>>, vector<32x96xf32>
    %cst_12 = arith.constant dense<0.000000e+00> : vector<8x96xf32>
    %27 = tpu.matmul %25, %26, %cst_12 {dimension_numbers = #tpu.dot_dimension_numbers<[1], [0], [0], [1], [0, 0, 1, 1], [], []>} : vector<8x32xf32>, vector<32x96xf32>, vector<8x96xf32> -> vector<8x96xf32>
    %28 = vector.extract_strided_slice %27 {offsets = [0, 0], sizes = [8, 8], strides = [1, 1]} : vector<8x96xf32> to vector<8x8xf32>
    %29 = vector.extract_strided_slice %27 {offsets = [0, 8], sizes = [8, 8], strides = [1, 1]} : vector<8x96xf32> to vector<8x8xf32>
    %30 = vector.extract_strided_slice %27 {offsets = [0, 16], sizes = [8, 8], strides = [1, 1]} : vector<8x96xf32> to vector<8x8xf32>
    %31 = vector.extract_strided_slice %27 {offsets = [0, 24], sizes = [8, 8], strides = [1, 1]} : vector<8x96xf32> to vector<8x8xf32>
    %32 = vector.shape_cast %28 : vector<8x8xf32> to vector<1x8x8xf32>
    %33 = vector.shape_cast %29 : vector<8x8xf32> to vector<1x8x8xf32>
    %34 = vector.shape_cast %30 : vector<8x8xf32> to vector<1x8x8xf32>
    %35 = vector.shape_cast %31 : vector<8x8xf32> to vector<1x8x8xf32>
    %36 = tpu.concatenate %32, %33, %34, %35 in 0 : vector<1x8x8xf32>, vector<1x8x8xf32>, vector<1x8x8xf32>, vector<1x8x8xf32> -> vector<4x8x8xf32>
    %37 = vector.extract_strided_slice %27 {offsets = [0, 32], sizes = [8, 8], strides = [1, 1]} : vector<8x96xf32> to vector<8x8xf32>
    %38 = vector.extract_strided_slice %27 {offsets = [0, 40], sizes = [8, 8], strides = [1, 1]} : vector<8x96xf32> to vector<8x8xf32>
    %39 = vector.extract_strided_slice %27 {offsets = [0, 48], sizes = [8, 8], strides = [1, 1]} : vector<8x96xf32> to vector<8x8xf32>
    %40 = vector.extract_strided_slice %27 {offsets = [0, 56], sizes = [8, 8], strides = [1, 1]} : vector<8x96xf32> to vector<8x8xf32>
    %41 = vector.shape_cast %37 : vector<8x8xf32> to vector<1x8x8xf32>
    %42 = vector.shape_cast %38 : vector<8x8xf32> to vector<1x8x8xf32>
    %43 = vector.shape_cast %39 : vector<8x8xf32> to vector<1x8x8xf32>
    %44 = vector.shape_cast %40 : vector<8x8xf32> to vector<1x8x8xf32>
    %45 = tpu.concatenate %41, %42, %43, %44 in 0 : vector<1x8x8xf32>, vector<1x8x8xf32>, vector<1x8x8xf32>, vector<1x8x8xf32> -> vector<4x8x8xf32>
    %46 = vector.extract_strided_slice %27 {offsets = [0, 64], sizes = [8, 8], strides = [1, 1]} : vector<8x96xf32> to vector<8x8xf32>
    %47 = vector.extract_strided_slice %27 {offsets = [0, 72], sizes = [8, 8], strides = [1, 1]} : vector<8x96xf32> to vector<8x8xf32>
    %48 = vector.extract_strided_slice %27 {offsets = [0, 80], sizes = [8, 8], strides = [1, 1]} : vector<8x96xf32> to vector<8x8xf32>
    %49 = vector.extract_strided_slice %27 {offsets = [0, 88], sizes = [8, 8], strides = [1, 1]} : vector<8x96xf32> to vector<8x8xf32>
    %50 = vector.shape_cast %46 : vector<8x8xf32> to vector<1x8x8xf32>
    %51 = vector.shape_cast %47 : vector<8x8xf32> to vector<1x8x8xf32>
    %52 = vector.shape_cast %48 : vector<8x8xf32> to vector<1x8x8xf32>
    %53 = vector.shape_cast %49 : vector<8x8xf32> to vector<1x8x8xf32>
    %54 = tpu.concatenate %50, %51, %52, %53 in 0 : vector<1x8x8xf32>, vector<1x8x8xf32>, vector<1x8x8xf32>, vector<1x8x8xf32> -> vector<4x8x8xf32>
    "tpu.trace_start"() <{level = 10 : i32, message = "hid,hjd->hij"}> : () -> ()
    %cst_13 = arith.constant dense<0.000000e+00> : vector<4x8x8xf32>
    %55 = tpu.matmul %36, %45, %cst_13 {dimension_numbers = #tpu.dot_dimension_numbers<[2], [2], [1], [1], [0, 0, 0, 1, 1, 1], [0], [0]>} : vector<4x8x8xf32>, vector<4x8x8xf32>, vector<4x8x8xf32> -> vector<4x8x8xf32>
    "tpu.trace_stop"() : () -> ()
    %cst_14 = arith.constant dense<0xFF800000> : vector<4x8xf32>
    %56 = vector.multi_reduction <maximumf>, %55, %cst_14 [2] : vector<4x8x8xf32> to vector<4x8xf32>
    %57 = vector.shape_cast %56 : vector<4x8xf32> to vector<4x8x1xf32>
    %58 = vector.broadcast %57 : vector<4x8x1xf32> to vector<4x8x8xf32>
    %59 = arith.subf %55, %58 : vector<4x8x8xf32>
    %60 = math.exp %59 : vector<4x8x8xf32>
    %cst_15 = arith.constant dense<0.000000e+00> : vector<4x8xf32>
    %61 = vector.multi_reduction <add>, %60, %cst_15 [2] : vector<4x8x8xf32> to vector<4x8xf32>
    %62 = vector.shape_cast %61 : vector<4x8xf32> to vector<4x8x1xf32>
    %63 = vector.broadcast %62 : vector<4x8x1xf32> to vector<4x8x8xf32>
    %64 = arith.divf %60, %63 : vector<4x8x8xf32>
    "tpu.trace_start"() <{level = 10 : i32, message = "hij,hjd->hid"}> : () -> ()
    %cst_16 = arith.constant dense<0.000000e+00> : vector<4x8x8xf32>
    %65 = tpu.matmul %64, %54, %cst_16 {dimension_numbers = #tpu.dot_dimension_numbers<[2], [1], [1], [2], [0, 0, 0, 1, 1, 2], [0], [0]>} : vector<4x8x8xf32>, vector<4x8x8xf32>, vector<4x8x8xf32> -> vector<4x8x8xf32>
    "tpu.trace_stop"() : () -> ()
    %66 = vector.extract_strided_slice %65 {offsets = [0, 0, 0], sizes = [1, 8, 8], strides = [1, 1, 1]} : vector<4x8x8xf32> to vector<1x8x8xf32>
    %67 = vector.shape_cast %66 : vector<1x8x8xf32> to vector<8x8xf32>
    %68 = vector.extract_strided_slice %65 {offsets = [1, 0, 0], sizes = [1, 8, 8], strides = [1, 1, 1]} : vector<4x8x8xf32> to vector<1x8x8xf32>
    %69 = vector.shape_cast %68 : vector<1x8x8xf32> to vector<8x8xf32>
    %70 = vector.extract_strided_slice %65 {offsets = [2, 0, 0], sizes = [1, 8, 8], strides = [1, 1, 1]} : vector<4x8x8xf32> to vector<1x8x8xf32>
    %71 = vector.shape_cast %70 : vector<1x8x8xf32> to vector<8x8xf32>
    %72 = vector.extract_strided_slice %65 {offsets = [3, 0, 0], sizes = [1, 8, 8], strides = [1, 1, 1]} : vector<4x8x8xf32> to vector<1x8x8xf32>
    %73 = vector.shape_cast %72 : vector<1x8x8xf32> to vector<8x8xf32>
    %74 = tpu.concatenate %67, %69, %71, %73 in 1 : vector<8x8xf32>, vector<8x8xf32>, vector<8x8xf32>, vector<8x8xf32> -> vector<8x32xf32>
    %c0_17 = arith.constant 0 : index
    %c0_18 = arith.constant 0 : index
    %75 = vector.load %arg5[%c0_17, %c0_18] : memref<32x32xf32, #tpu.memory_space<vmem>>, vector<32x32xf32>
    %cst_19 = arith.constant dense<0.000000e+00> : vector<8x32xf32>
    %76 = tpu.matmul %74, %75, %cst_19 {dimension_numbers = #tpu.dot_dimension_numbers<[1], [0], [0], [1], [0, 0, 1, 1], [], []>} : vector<8x32xf32>, vector<32x32xf32>, vector<8x32xf32> -> vector<8x32xf32>
    %c0_20 = arith.constant 0 : index
    %c0_21 = arith.constant 0 : index
    %77 = vector.load %arg6[%c0_20, %c0_21] : memref<1x32xf32, #tpu.memory_space<vmem>>, vector<1x32xf32>
    %78 = vector.broadcast %77 : vector<1x32xf32> to vector<8x32xf32>
    %79 = arith.addf %76, %78 : vector<8x32xf32>
    %80 = arith.addf %1, %79 : vector<8x32xf32>
    %c0_22 = arith.constant 0 : index
    %c0_23 = arith.constant 0 : index
    %c0_24 = arith.constant 0 : index
    %81 = vector.load %arg7[%c0_22, %c0_23, %c0_24] : memref<1x8x32xf32, #tpu.memory_space<vmem>>, vector<1x8x32xf32>
    %82 = vector.shape_cast %81 : vector<1x8x32xf32> to vector<8x32xf32>
    %83 = vector.shape_cast %80 : vector<8x32xf32> to vector<1x8x32xf32>
    tpu.vector_store %arg7[%c0_22, %c0_23, %c0_24], %83 {strides = array<i32>} : memref<1x8x32xf32, #tpu.memory_space<vmem>>, vector<1x8x32xf32>,
    return
  }
  func.func @transform_0(%arg0: i32) -> (i32, i32, i32) {
    %c0_i32 = arith.constant 0 : i32
    %c0_i32_0 = arith.constant 0 : i32
    %c0_i32_1 = arith.constant 0 : i32
    return %arg0, %c0_i32, %c0_i32_0 : i32, i32, i32
  }
  func.func @transform_1(%arg0: i32) -> (i32, i32) {
    %c0_i32 = arith.constant 0 : i32
    %c0_i32_0 = arith.constant 0 : i32
    %c0_i32_1 = arith.constant 0 : i32
    return %c0_i32, %c0_i32_0 : i32, i32
  }
  func.func @transform_2(%arg0: i32) -> (i32, i32) {
    %c0_i32 = arith.constant 0 : i32
    %c0_i32_0 = arith.constant 0 : i32
    %c0_i32_1 = arith.constant 0 : i32
    return %c0_i32, %c0_i32_0 : i32, i32
  }
  func.func @transform_3(%arg0: i32) -> (i32, i32) {
    %c0_i32 = arith.constant 0 : i32
    %c0_i32_0 = arith.constant 0 : i32
    %c0_i32_1 = arith.constant 0 : i32
    return %c0_i32, %c0_i32_0 : i32, i32
  }
  func.func @transform_4(%arg0: i32) -> (i32, i32) {
    %c0_i32 = arith.constant 0 : i32
    %c0_i32_0 = arith.constant 0 : i32
    %c0_i32_1 = arith.constant 0 : i32
    return %c0_i32, %c0_i32_0 : i32, i32
  }
  func.func @transform_5(%arg0: i32) -> (i32, i32) {
    %c0_i32 = arith.constant 0 : i32
    %c0_i32_0 = arith.constant 0 : i32
    %c0_i32_1 = arith.constant 0 : i32
    return %c0_i32, %c0_i32_0 : i32, i32
  }
  func.func @transform_6(%arg0: i32) -> (i32, i32, i32) {
    %c0_i32 = arith.constant 0 : i32
    %c0_i32_0 = arith.constant 0 : i32
    %c0_i32_1 = arith.constant 0 : i32
    return %arg0, %c0_i32, %c0_i32_0 : i32, i32, i32
  }
}

</mosaic_0001>

<llo_original>
// kernel: tpu_custom_call.1
$region0: #{tpu_custom_call.1}
  #allocation0 [shape = 'u32[]', space=smem, size = 0x4, offset = 0x4, fixed_abs, tag = 'smem constant byte address 0x4 - core index']
  #allocation1 [shape = 'u32[144,128]{1,0:T(1,128)}', space=vmem, size = 0x12000, scoped, tag = 'internal scratch']
  %s0 = inlined_call_operand.hbm [shape: f32[2,8,32], index: 0, kind: input, shape index: {}]
  %s1 = inlined_call_operand.vmem [shape: f32[1,32], index: 1, kind: input, shape index: {}]
  %s2 = inlined_call_operand.vmem [shape: f32[1,32], index: 2, kind: input, shape index: {}]
  %s3 = inlined_call_operand.hbm [shape: f32[32,96], index: 3, kind: input, shape index: {}]
  %s4 = inlined_call_operand.hbm [shape: f32[32,32], index: 4, kind: input, shape index: {}]
  %s5 = inlined_call_operand.vmem [shape: f32[1,32], index: 5, kind: input, shape index: {}]
  %s6 = inlined_call_operand.hbm [shape: f32[2,8,32], index: 6, kind: output, shape index: {}]
  %s7 = sld [smem:[#allocation0]]
  $region69: #{tpu_custom_call.1} parent=0
    _
  %s9 = ssub.s32 1, %s7
  %s10 = scalar_select 0, %s9, %s7
  $region1: #{tpu_custom_call.1} parent=0
    #allocation2 [shape = 'u8[8192]{0}', space=vmem, size = 0x2000, scoped, tag = 'input window, operand 0']
    #allocation3 [shape = 's32[2]{0}', space=sflag, size = 0x8, scoped, tag = 'scoped memory for tpu_custom_call.1']
    #allocation4 [shape = 's32[2]{0}', space=sflag, size = 0x8, scoped, tag = 'scoped memory for tpu_custom_call.1']
    #allocation5 [shape = 'u8[16384]{0}', space=vmem, size = 0x4000, scoped, tag = 'input window, operand 3, single buffered']
    #allocation6 [shape = 's32[1]{0}', space=sflag, size = 0x4, scoped, tag = 'scoped memory for tpu_custom_call.1']
    #allocation7 [shape = 'u8[16384]{0}', space=vmem, size = 0x4000, scoped, tag = 'input window, operand 4, single buffered']
    #allocation8 [shape = 'u8[8192]{0}', space=vmem, size = 0x2000, scoped, tag = 'output window, operand 0']
    %11 = vsyncpa [#allocation3], 0
    %s12 = scalar_lea.sflag [#allocation3], 1
    %13 = vsyncpa %s12, 0
    %14 = vsyncpa [#allocation6], 0
    %15 = vsyncpa [#allocation4], 0
    %s16 = scalar_lea.sflag [#allocation4], 1
    %17 = vsyncpa %s16, 0
    loop: start=0, step=1, limit=4
    $region2: #{tpu_custom_call.1} parent=1 // loop_pre_header
      _
    $region3: #{tpu_custom_call.1} parent=1 // loop_header
      %s19 = sphi 0, %s23
      %p20 = scmp.ge.s32.totalorder %s19, 4
      %s29 = sphi 0, %s31
      %s32 = sphi 0, %s29
      %s33 = sphi 0, %s32
      %s49 = sphi 0, %s33
      %s53 = sphi 0, %s53
      %s55 = sphi 0, %s53
      %s56 = sphi 0, %s55
      %s70 = sphi 0, %s56
      %s74 = sphi 0, %s74
      %s76 = sphi 0, %s74
      %s77 = sphi 0, %s76
      %s91 = sphi 0, %s77
      %s95 = sphi 0, %s95
      %s97 = sphi 0, %s95
      %s98 = sphi 0, %s97
      %s112 = sphi 0, %s98
      %s116 = sphi 0, %s116
      %s118 = sphi 0, %s116
      %s119 = sphi 0, %s118
      %s133 = sphi 0, %s119
      %s137 = sphi 0, %s137
      %s139 = sphi 0, %s137
      %s140 = sphi 0, %s139
      %s154 = sphi 0, %s140
      %s160 = sphi 0, %s162
      %s163 = sphi 0, %s160
      %s164 = sphi 0, %s163
      %s180 = sphi 0, %s164
    $region4: #{tpu_custom_call.1} parent=1 // loop_header_branch
      %22 = sbr.rel (%p20) target = $region8
    $region5: #{tpu_custom_call.1} parent=1 // loop_body
      %s24 = ssub.s32 %s19, 1
      %s25 = ssub.s32 %s19, 2
      %s26 = sadd.s32 %s19, 1
      %s27 = ssub.s32 %s19, %s26
      %p28 = scmp.eq.s32.totalorder %s27, 0
      %s30 = sadd.s32 %s29, 1
      %s31 = scalar_select %p28, %s29, %s30
      %p34 = pneg %p28
      %p35 = scmp.eq.s32.totalorder %s19, 1
      %p36 = por %p34, %p35
      %p37 = scmp.ne.s32.totalorder %s29, %s32
      %p38 = scmp.eq.s32.totalorder %s19, 0
      %p39 = por %p37, %p38
      %p40 = scmp.ne.s32.totalorder %s29, %s32
      %p41 = scmp.eq.s32.totalorder %s24, 1
      %p42 = por %p40, %p41
      %p43 = scmp.ne.s32.totalorder %s32, %s33
      %p44 = scmp.eq.s32.totalorder %s24, 0
      %p45 = por %p43, %p44
      %p46 = scmp.ne.s32.totalorder %s32, %s33
      %p47 = scmp.eq.s32.totalorder %s25, 1
      %p48 = por %p46, %p47
      %p50 = scmp.ne.s32.totalorder %s33, %s49
      %p51 = scmp.eq.s32.totalorder %s25, 0
      %p52 = por %p50, %p51
      %s54 = sadd.s32 %s53, 1
      %p57 = scmp.eq.s32.totalorder %s19, 1
      %p58 = scmp.ne.s32.totalorder %s53, %s55
      %p59 = scmp.eq.s32.totalorder %s19, 0
      %p60 = por %p58, %p59
      %p61 = scmp.ne.s32.totalorder %s53, %s55
      %p62 = scmp.eq.s32.totalorder %s24, 1
      %p63 = por %p61, %p62
      %p64 = scmp.ne.s32.totalorder %s55, %s56
      %p65 = scmp.eq.s32.totalorder %s24, 0
      %p66 = por %p64, %p65
      %p67 = scmp.ne.s32.totalorder %s55, %s56
      %p68 = scmp.eq.s32.totalorder %s25, 1
      %p69 = por %p67, %p68
      %p71 = scmp.ne.s32.totalorder %s56, %s70
      %p72 = scmp.eq.s32.totalorder %s25, 0
      %p73 = por %p71, %p72
      %s75 = sadd.s32 %s74, 1
      %p78 = scmp.eq.s32.totalorder %s19, 1
      %p79 = scmp.ne.s32.totalorder %s74, %s76
      %p80 = scmp.eq.s32.totalorder %s19, 0
      %p81 = por %p79, %p80
      %p82 = scmp.ne.s32.totalorder %s74, %s76
      %p83 = scmp.eq.s32.totalorder %s24, 1
      %p84 = por %p82, %p83
      %p85 = scmp.ne.s32.totalorder %s76, %s77
      %p86 = scmp.eq.s32.totalorder %s24, 0
      %p87 = por %p85, %p86
      %p88 = scmp.ne.s32.totalorder %s76, %s77
      %p89 = scmp.eq.s32.totalorder %s25, 1
      %p90 = por %p88, %p89
      %p92 = scmp.ne.s32.totalorder %s77, %s91
      %p93 = scmp.eq.s32.totalorder %s25, 0
      %p94 = por %p92, %p93
      %s96 = sadd.s32 %s95, 1
      %p99 = scmp.eq.s32.totalorder %s19, 1
      %p100 = scmp.ne.s32.totalorder %s95, %s97
      %p101 = scmp.eq.s32.totalorder %s19, 0
      %p102 = por %p100, %p101
      %p103 = scmp.ne.s32.totalorder %s95, %s97
      %p104 = scmp.eq.s32.totalorder %s24, 1
      %p105 = por %p103, %p104
      %p106 = scmp.ne.s32.totalorder %s97, %s98
      %p107 = scmp.eq.s32.totalorder %s24, 0
      %p108 = por %p106, %p107
      %p109 = scmp.ne.s32.totalorder %s97, %s98
      %p110 = scmp.eq.s32.totalorder %s25, 1
      %p111 = por %p109, %p110
      %p113 = scmp.ne.s32.totalorder %s98, %s112
      %p114 = scmp.eq.s32.totalorder %s25, 0
      %p115 = por %p113, %p114
      %s117 = sadd.s32 %s116, 1
      %p120 = scmp.eq.s32.totalorder %s19, 1
      %p121 = scmp.ne.s32.totalorder %s116, %s118
      %p122 = scmp.eq.s32.totalorder %s19, 0
      %p123 = por %p121, %p122
      %p124 = scmp.ne.s32.totalorder %s116, %s118
      %p125 = scmp.eq.s32.totalorder %s24, 1
      %p126 = por %p124, %p125
      %p127 = scmp.ne.s32.totalorder %s118, %s119
      %p128 = scmp.eq.s32.totalorder %s24, 0
      %p129 = por %p127, %p128
      %p130 = scmp.ne.s32.totalorder %s118, %s119
      %p131 = scmp.eq.s32.totalorder %s25, 1
      %p132 = por %p130, %p131
      %p134 = scmp.ne.s32.totalorder %s119, %s133
      %p135 = scmp.eq.s32.totalorder %s25, 0
      %p136 = por %p134, %p135
      %s138 = sadd.s32 %s137, 1
      %p141 = scmp.eq.s32.totalorder %s19, 1
      %p142 = scmp.ne.s32.totalorder %s137, %s139
      %p143 = scmp.eq.s32.totalorder %s19, 0
      %p144 = por %p142, %p143
      %p145 = scmp.ne.s32.totalorder %s137, %s139
      %p146 = scmp.eq.s32.totalorder %s24, 1
      %p147 = por %p145, %p146
      %p148 = scmp.ne.s32.totalorder %s139, %s140
      %p149 = scmp.eq.s32.totalorder %s24, 0
      %p150 = por %p148, %p149
      %p151 = scmp.ne.s32.totalorder %s139, %s140
      %p152 = scmp.eq.s32.totalorder %s25, 1
      %p153 = por %p151, %p152
      %p155 = scmp.ne.s32.totalorder %s140, %s154
      %p156 = scmp.eq.s32.totalorder %s25, 0
      %p157 = por %p155, %p156
      %s158 = ssub.s32 %s19, %s26
      %p159 = scmp.eq.s32.totalorder %s158, 0
      %s161 = sadd.s32 %s160, 1
      %s162 = scalar_select %p159, %s160, %s161
      %p165 = pneg %p159
      %p166 = scmp.eq.s32.totalorder %s19, 1
      %p167 = por %p165, %p166
      %p168 = scmp.ne.s32.totalorder %s160, %s163
      %p169 = scmp.eq.s32.totalorder %s19, 0
      %p170 = por %p168, %p169
      %p171 = scmp.ne.s32.totalorder %s160, %s163
      %p172 = scmp.eq.s32.totalorder %s24, 1
      %p173 = por %p171, %p172
      %p174 = scmp.ne.s32.totalorder %s163, %s164
      %p175 = scmp.eq.s32.totalorder %s24, 0
      %p176 = por %p174, %p175
      %p177 = scmp.ne.s32.totalorder %s163, %s164
      %p178 = scmp.eq.s32.totalorder %s25, 1
      %p179 = por %p177, %p178
      %p181 = scmp.ne.s32.totalorder %s164, %s180
      %p182 = scmp.eq.s32.totalorder %s25, 0
      %p183 = por %p181, %p182
      %p184 = scmp.le.s32.totalorder 1, %s19
      %p185 = scmp.lt.s32.totalorder %s19, 3
      %p186 = pnand %p184, %p185
      %p187 = pneg %p186
      // Predicated region
      $region9: #{tpu_custom_call.1} parent=5 // pred_check
        _
      $region10: #{tpu_custom_call.1} parent=5 // pred_check_branch
        %189 = sbr.rel (%p186) target = $region12
      $region11: #{tpu_custom_call.1} parent=5 // pred_region
        %s190 = ssub.s32 %s19, 1
        // Predicated region
        $region13: #{tpu_custom_call.1} parent=11 // pred_check
          %p191 = pneg %p66
        $region14: #{tpu_custom_call.1} parent=11 // pred_check_branch
          %193 = sbr.rel (%p191) target = $region16
        $region15: #{tpu_custom_call.1} parent=11 // pred_region
          _
        $region16: #{tpu_custom_call.1} parent=11 // pred_fallthru
          _
        // Predicated region
        $region17: #{tpu_custom_call.1} parent=11 // pred_check
          %p194 = pneg %p87
        $region18: #{tpu_custom_call.1} parent=11 // pred_check_branch
          %196 = sbr.rel (%p194) target = $region20
        $region19: #{tpu_custom_call.1} parent=11 // pred_region
          _
        $region20: #{tpu_custom_call.1} parent=11 // pred_fallthru
          _
        // Predicated region
        $region21: #{tpu_custom_call.1} parent=11 // pred_check
          %p197 = pneg %p108
        $region22: #{tpu_custom_call.1} parent=11 // pred_check_branch
          %199 = sbr.rel (%p197) target = $region24
        $region23: #{tpu_custom_call.1} parent=11 // pred_region
          %s201 = ssub.s32 512, 512
          %202 = vsyncadd [#allocation6], %s201
          %s203 = sshll.u32 [#allocation5], 4
          %s204 = int_to_ptr.vmem [resolvable:$true] %s203
          %209 = dma.hbm_to_vmem [thread:$0]  %s3, 512, %s204, [#allocation6], 128, 128, 8
        $region24: #{tpu_custom_call.1} parent=11 // pred_fallthru
          _
        // Predicated region
        $region25: #{tpu_custom_call.1} parent=11 // pred_check
          %p210 = pneg %p129
        $region26: #{tpu_custom_call.1} parent=11 // pred_check_branch
          %212 = sbr.rel (%p210) target = $region28
        $region27: #{tpu_custom_call.1} parent=11 // pred_region
          %s214 = ssub.s32 512, 512
          %215 = vsyncadd [#allocation6], %s214
          %s216 = sshll.u32 [#allocation7], 4
          %s217 = int_to_ptr.vmem [resolvable:$true] %s216
          %222 = dma.hbm_to_vmem [thread:$0]  %s4, 512, %s217, [#allocation6], 128, 128, 8
        $region28: #{tpu_custom_call.1} parent=11 // pred_fallthru
          _
        // Predicated region
        $region29: #{tpu_custom_call.1} parent=11 // pred_check
          %p223 = pneg %p150
        $region30: #{tpu_custom_call.1} parent=11 // pred_check_branch
          %225 = sbr.rel (%p223) target = $region32
        $region31: #{tpu_custom_call.1} parent=11 // pred_region
          _
        $region32: #{tpu_custom_call.1} parent=11 // pred_fallthru
          _
      $region12: #{tpu_custom_call.1} parent=5 // pred_fallthru
        _
      %p226 = scmp.lt.s32.totalorder %s19, 2
      // Predicated region
      $region33: #{tpu_custom_call.1} parent=5 // pred_check
        %p227 = pneg %p226
      $region34: #{tpu_custom_call.1} parent=5 // pred_check_branch
        %229 = sbr.rel (%p227) target = $region36
      $region35: #{tpu_custom_call.1} parent=5 // pred_region
        // Predicated region
        $region37: #{tpu_custom_call.1} parent=35 // pred_check
          %p230 = pneg %p39
        $region38: #{tpu_custom_call.1} parent=35 // pred_check_branch
          %232 = sbr.rel (%p230) target = $region40
        $region39: #{tpu_custom_call.1} parent=35 // pred_region
          %s233 = sand.u32 %s29, 1
          %s234 = scalar_lea.sflag [#allocation3], %s233
          %s235 = sand.u32 %s29, 1
          %s236 = smul.addr %s235, 8
          %s237 = scalar_lea.vmem [#allocation2], %s236
          %s239 = ssub.s32 128, 128
          %240 = vsyncadd %s234, %s239
          %s241 = smul.addr %s19, 128
          %s242 = scalar_lea.hbm %s0, %s241
          %s244 = sshll.u32 %s237, 4
          %s245 = int_to_ptr.vmem [resolvable:$true] %s244
          %247 = dma.hbm_to_vmem [thread:$0]  %s242, 128, %s245, %s234
        $region40: #{tpu_custom_call.1} parent=35 // pred_fallthru
          _
      $region36: #{tpu_custom_call.1} parent=5 // pred_fallthru
        _
      %p248 = scmp.le.s32.totalorder 1, %s19
      %p249 = scmp.lt.s32.totalorder %s19, 3
      %p250 = pnand %p248, %p249
      %p251 = pneg %p250
      // Predicated region
      $region41: #{tpu_custom_call.1} parent=5 // pred_check
        _
      $region42: #{tpu_custom_call.1} parent=5 // pred_check_branch
        %253 = sbr.rel (%p250) target = $region44
      $region43: #{tpu_custom_call.1} parent=5 // pred_region
        %s254 = ssub.s32 %s19, 1
        %s255 = sand.u32 %s32, 1
        %s256 = scalar_lea.sflag [#allocation3], %s255
        %s257 = sand.u32 %s32, 1
        %s258 = smul.addr %s257, 8
        %s259 = scalar_lea.vmem [#allocation2], %s258
        // Predicated region
        $region45: #{tpu_custom_call.1} parent=43 // pred_check
          %p260 = pneg %p45
        $region46: #{tpu_custom_call.1} parent=43 // pred_check_branch
          %262 = sbr.rel (%p260) target = $region48
        $region47: #{tpu_custom_call.1} parent=43 // pred_region
          %263 = dma.done %s256, 128
        $region48: #{tpu_custom_call.1} parent=43 // pred_fallthru
          _
        // Predicated region
        $region49: #{tpu_custom_call.1} parent=43 // pred_check
          %p264 = pneg %p108
        $region50: #{tpu_custom_call.1} parent=43 // pred_check_branch
          %266 = sbr.rel (%p264) target = $region52
        $region51: #{tpu_custom_call.1} parent=43 // pred_region
          %267 = dma.done [#allocation6], 512
        $region52: #{tpu_custom_call.1} parent=43 // pred_fallthru
          _
        // Predicated region
        $region53: #{tpu_custom_call.1} parent=43 // pred_check
          %p268 = pneg %p129
        $region54: #{tpu_custom_call.1} parent=43 // pred_check_branch
          %270 = sbr.rel (%p268) target = $region56
        $region55: #{tpu_custom_call.1} parent=43 // pred_region
          %271 = dma.done [#allocation6], 512
        $region56: #{tpu_custom_call.1} parent=43 // pred_fallthru
          _
        %s272 = sand.u32 %s32, 1
        %s273 = scalar_lea.sflag [#allocation3], %s272
        %s274 = sand.u32 %s32, 1
        %s275 = smul.addr %s274, 8
        %s276 = scalar_lea.vmem [#allocation2], %s275
        %p277 = pneg %p45
        %p278 = pneg %p42
        %p279 = pneg %p66
        %p280 = pneg %p63
        %p281 = pneg %p87
        %p282 = pneg %p84
        %p283 = pneg %p108
        %p284 = pneg %p105
        %p285 = pneg %p129
        %p286 = pneg %p126
        %p287 = pneg %p150
        %p288 = pneg %p147
        %p289 = pneg %p176
        %p290 = pneg %p173
        %s291 = sand.u32 %s163, 1
        %s292 = scalar_lea.sflag [#allocation4], %s291
        %s293 = sand.u32 %s163, 1
        %s294 = smul.addr %s293, 8
        %s295 = scalar_lea.vmem [#allocation8], %s294
        %v296 = vld [vmem:[%s259] sm:$0xff]
        %v297 = vld [vmem:[%s1] sm:$0x1]
        %v298 = vld [vmem:[%s2] sm:$0x1]
        %vm299 = vcmask 261120
        %v300 = vsel %vm299, %v296, 0.0
        %301 = vadd.xlane.f32.xlu0 %v300
        %v302 = vpop.xlane.xlu0 %301
        %v303 = vrcp.pop 32.0
        %v304 = vmul.f32 %v302, %v303
        %v305 = vsub.f32 %v296, %v304
        %v306 = vmul.f32 %v305, %v305
        %v307 = vsel %vm299, %v306, 0.0
        %308 = vadd.xlane.f32.xlu0 %v307
        %v309 = vpop.xlane.xlu0 %308
        %v310 = vmul.f32 %v309, %v303
        %v311 = vadd.f32 %v310, 1e-05
        %v312 = vrsqrt.pop %v311
        %v313 = vmul.f32 %v305, %v312
        %v315 = vlaneseq
        %v316 = vshrl.u32 %v315, 7
        %v317 = vsub.s32 0, %v316
        %v318 = vrot.slane %v297, %v317
        %v320 = vmul.f32 %v313, %v318
        %v322 = vlaneseq
        %v323 = vshrl.u32 %v322, 7
        %v324 = vsub.s32 0, %v323
        %v325 = vrot.slane %v298, %v324
        %v327 = vadd.f32 %v320, %v325
        %v328 = vld [vmem:[#allocation5] sm:$0xff]
        %v329 = vld [vmem:[#allocation5 + $0x8] sm:$0xff]
        %v330 = vld [vmem:[#allocation5 + $0x10] sm:$0xff]
        %v331 = vld [vmem:[#allocation5 + $0x18] sm:$0xff]
        %v333 = vsel %vm299, %v327, 0
        %335 = vmatprep.subr.mxu0 0.0
        %336 = vmatpush1.msra.mxu0 %v328
        %337 = vmatprep.subr.mxu0 0.0
        %338 = vmatpush1.msra.mxu0 %v329
        %339 = vmatprep.subr.mxu0 0.0
        %340 = vmatpush1.msra.mxu0 %v330
        %341 = vmatprep.subr.mxu0 0.0
        %342 = vmatpush1.msra.mxu0 %v331
        %343 = vmatprep.subr.mxu0 0.0
        %344 = vmatpush1.msra.mxu0 0.0
        %345 = vmatprep.subr.mxu0 0.0
        %346 = vmatpush1.msra.mxu0 0.0
        %347 = vmatprep.subr.mxu0 0.0
        %348 = vmatpush1.msra.mxu0 0.0
        %349 = vmatprep.subr.mxu0 0.0
        %350 = vmatpush1.msra.mxu0 0.0
        %351 = vmatprep.subr.mxu0 0.0
        %352 = vmatpush1.msra.mxu0 0.0
        %353 = vmatprep.subr.mxu0 0.0
        %354 = vmatpush1.msra.mxu0 0.0
        %355 = vmatprep.subr.mxu0 0.0
        %356 = vmatpush1.msra.mxu0 0.0
        %357 = vmatprep.subr.mxu0 0.0
        %358 = vmatpush1.msra.mxu0 0.0
        %359 = vmatprep.subr.mxu0 0.0
        %360 = vmatpush1.msra.mxu0 0.0
        %361 = vmatprep.subr.mxu0 0.0
        %362 = vmatpush1.msra.mxu0 0.0
        %363 = vmatprep.subr.mxu0 0.0
        %364 = vmatpush1.msra.mxu0 0.0
        %365 = vmatprep.subr.mxu0 0.0
        %366 = vmatpush1.msra.mxu0 0.0
        %367 = vmatprep.subr.mxu0 0.0
        %368 = vmatpush1.msra.mxu0 0.0
        %369 = vmatprep.subr.mxu0 0.0
        %370 = vmatpush1.msra.mxu0 0.0
        %371 = vmatprep.subr.mxu0 0.0
        %372 = vmatpush1.msra.mxu0 0.0
        %373 = vmatprep.subr.mxu0 0.0
        %374 = vmatpush1.msra.mxu0 0.0
        %375 = vmatprep.subr.mxu0 0.0
        %376 = vmatpush1.msra.mxu0 0.0
        %377 = vmatprep.subr.mxu0 0.0
        %378 = vmatpush1.msra.mxu0 0.0
        %379 = vmatprep.subr.mxu0 0.0
        %380 = vmatpush1.msra.mxu0 0.0
        %381 = vmatprep.subr.mxu0 0.0
        %382 = vmatpush1.msra.mxu0 0.0
        %383 = vmatprep.subr.mxu0 0.0
        %384 = vmatpush1.msra.mxu0 0.0
        %385 = vmatprep.subr.mxu0 0.0
        %386 = vmatpush1.msra.mxu0 0.0
        %387 = vmatprep.subr.mxu0 0.0
        %388 = vmatpush1.msra.mxu0 0.0
        %389 = vmatprep.subr.mxu0 0.0
        %390 = vmatpush1.msra.mxu0 0.0
        %391 = vmatprep.subr.mxu0 0.0
        %392 = vmatpush1.msra.mxu0 0.0
        %393 = vmatprep.subr.mxu0 0.0
        %394 = vmatpush1.msra.mxu0 0.0
        %395 = vmatprep.subr.mxu0 0.0
        %396 = vmatpush1.msra.mxu0 0.0
        %397 = vmatprep.subr.mxu0 0.0
        %398 = vmatpush1.msra.mxu0 0.0
        %399 = vmatprep.mubr.f32.mxu0 0.0
        %400 = vmatmul.mubr.f32.gmra.mrb[0].mxu0 %v333
        %v401 = vpop.f32.mrb[0].mxu0
        %v402 = vadd.f32 0.0, %v401
        %v403 = vpop.f32.mrb[0].mxu0
        %404 = vdwg.mxu0
        %406 = vrot.lane.b32.xlu0 %v402, 120
        %v407 = vpop.permute.xlu0 %406
        %408 = vrot.lane.b32.xlu0 %v402, 112
        %v409 = vpop.permute.xlu0 %408
        %410 = vrot.lane.b32.xlu0 %v402, 104
        %v411 = vpop.permute.xlu0 %410
        %412 = vrot.lane.b32.xlu0 %v402, 96
        %v413 = vpop.permute.xlu0 %412
        %vm414 = vcmask 64512
        %v415 = vsel %vm414, %v402, 0
        %v417 = vsel %vm414, %v413, 0
        %419 = vmatprep.subr.mxu0 0.0
        %420 = vmatpush1.xpose.msra.mxu0 %v417
        %421 = vmatprep.subr.mxu0 0.0
        %422 = vmatpush1.xpose.msra.mxu0 0.0
        %423 = vmatprep.subr.mxu0 0.0
        %424 = vmatpush1.xpose.msra.mxu0 0.0
        %425 = vmatprep.subr.mxu0 0.0
        %426 = vmatpush1.xpose.msra.mxu0 0.0
        %427 = vmatprep.subr.mxu0 0.0
        %428 = vmatpush1.xpose.msra.mxu0 0.0
        %429 = vmatprep.subr.mxu0 0.0
        %430 = vmatpush1.xpose.msra.mxu0 0.0
        %431 = vmatprep.subr.mxu0 0.0
        %432 = vmatpush1.xpose.msra.mxu0 0.0
        %433 = vmatprep.subr.mxu0 0.0
        %434 = vmatpush1.xpose.msra.mxu0 0.0
        %435 = vmatprep.subr.mxu0 0.0
        %436 = vmatpush1.xpose.msra.mxu0 0.0
        %437 = vmatprep.subr.mxu0 0.0
        %438 = vmatpush1.xpose.msra.mxu0 0.0
        %439 = vmatprep.subr.mxu0 0.0
        %440 = vmatpush1.xpose.msra.mxu0 0.0
        %441 = vmatprep.subr.mxu0 0.0
        %442 = vmatpush1.xpose.msra.mxu0 0.0
        %443 = vmatprep.subr.mxu0 0.0
        %444 = vmatpush1.xpose.msra.mxu0 0.0
        %445 = vmatprep.subr.mxu0 0.0
        %446 = vmatpush1.xpose.msra.mxu0 0.0
        %447 = vmatprep.subr.mxu0 0.0
        %448 = vmatpush1.xpose.msra.mxu0 0.0
        %449 = vmatprep.subr.mxu0 0.0
        %450 = vmatpush1.xpose.msra.mxu0 0.0
        %451 = vmatprep.subr.mxu0 0.0
        %452 = vmatpush1.xpose.msra.mxu0 0.0
        %453 = vmatprep.subr.mxu0 0.0
        %454 = vmatpush1.xpose.msra.mxu0 0.0
        %455 = vmatprep.subr.mxu0 0.0
        %456 = vmatpush1.xpose.msra.mxu0 0.0
        %457 = vmatprep.subr.mxu0 0.0
        %458 = vmatpush1.xpose.msra.mxu0 0.0
        %459 = vmatprep.subr.mxu0 0.0
        %460 = vmatpush1.xpose.msra.mxu0 0.0
        %461 = vmatprep.subr.mxu0 0.0
        %462 = vmatpush1.xpose.msra.mxu0 0.0
        %463 = vmatprep.subr.mxu0 0.0
        %464 = vmatpush1.xpose.msra.mxu0 0.0
        %465 = vmatprep.subr.mxu0 0.0
        %466 = vmatpush1.xpose.msra.mxu0 0.0
        %467 = vmatprep.subr.mxu0 0.0
        %468 = vmatpush1.xpose.msra.mxu0 0.0
        %469 = vmatprep.subr.mxu0 0.0
        %470 = vmatpush1.xpose.msra.mxu0 0.0
        %471 = vmatprep.subr.mxu0 0.0
        %472 = vmatpush1.xpose.msra.mxu0 0.0
        %473 = vmatprep.subr.mxu0 0.0
        %474 = vmatpush1.xpose.msra.mxu0 0.0
        %475 = vmatprep.subr.mxu0 0.0
        %476 = vmatpush1.xpose.msra.mxu0 0.0
        %477 = vmatprep.subr.mxu0 0.0
        %478 = vmatpush1.xpose.msra.mxu0 0.0
        %479 = vmatprep.subr.mxu0 0.0
        %480 = vmatpush1.xpose.msra.mxu0 0.0
        %481 = vmatprep.subr.mxu0 0.0
        %482 = vmatpush1.xpose.msra.mxu0 0.0
        %483 = vmatprep.mubr.f32.mxu0 0.0
        %484 = vmatmul.mubr.f32.gmra.mrb[0].mxu0 %v415
        %v485 = vpop.f32.mrb[0].mxu0
        %v486 = vadd.f32 0.0, %v485
        %v487 = vpop.f32.mrb[0].mxu0
        %488 = vdwg.mxu0
        %489 = vrot.lane.b32.xlu0 %v407, 96
        %v490 = vpop.permute.xlu0 %489
        %v491 = vsel %vm414, %v407, 0
        %v493 = vsel %vm414, %v490, 0
        %495 = vmatprep.subr.mxu0 0.0
        %496 = vmatpush1.xpose.msra.mxu0 %v493
        %497 = vmatprep.subr.mxu0 0.0
        %498 = vmatpush1.xpose.msra.mxu0 0.0
        %499 = vmatprep.subr.mxu0 0.0
        %500 = vmatpush1.xpose.msra.mxu0 0.0
        %501 = vmatprep.subr.mxu0 0.0
        %502 = vmatpush1.xpose.msra.mxu0 0.0
        %503 = vmatprep.subr.mxu0 0.0
        %504 = vmatpush1.xpose.msra.mxu0 0.0
        %505 = vmatprep.subr.mxu0 0.0
        %506 = vmatpush1.xpose.msra.mxu0 0.0
        %507 = vmatprep.subr.mxu0 0.0
        %508 = vmatpush1.xpose.msra.mxu0 0.0
        %509 = vmatprep.subr.mxu0 0.0
        %510 = vmatpush1.xpose.msra.mxu0 0.0
        %511 = vmatprep.subr.mxu0 0.0
        %512 = vmatpush1.xpose.msra.mxu0 0.0
        %513 = vmatprep.subr.mxu0 0.0
        %514 = vmatpush1.xpose.msra.mxu0 0.0
        %515 = vmatprep.subr.mxu0 0.0
        %516 = vmatpush1.xpose.msra.mxu0 0.0
        %517 = vmatprep.subr.mxu0 0.0
        %518 = vmatpush1.xpose.msra.mxu0 0.0
        %519 = vmatprep.subr.mxu0 0.0
        %520 = vmatpush1.xpose.msra.mxu0 0.0
        %521 = vmatprep.subr.mxu0 0.0
        %522 = vmatpush1.xpose.msra.mxu0 0.0
        %523 = vmatprep.subr.mxu0 0.0
        %524 = vmatpush1.xpose.msra.mxu0 0.0
        %525 = vmatprep.subr.mxu0 0.0
        %526 = vmatpush1.xpose.msra.mxu0 0.0
        %527 = vmatprep.subr.mxu0 0.0
        %528 = vmatpush1.xpose.msra.mxu0 0.0
        %529 = vmatprep.subr.mxu0 0.0
        %530 = vmatpush1.xpose.msra.mxu0 0.0
        %531 = vmatprep.subr.mxu0 0.0
        %532 = vmatpush1.xpose.msra.mxu0 0.0
        %533 = vmatprep.subr.mxu0 0.0
        %534 = vmatpush1.xpose.msra.mxu0 0.0
        %535 = vmatprep.subr.mxu0 0.0
        %536 = vmatpush1.xpose.msra.mxu0 0.0
        %537 = vmatprep.subr.mxu0 0.0
        %538 = vmatpush1.xpose.msra.mxu0 0.0
        %539 = vmatprep.subr.mxu0 0.0
        %540 = vmatpush1.xpose.msra.mxu0 0.0
        %541 = vmatprep.subr.mxu0 0.0
        %542 = vmatpush1.xpose.msra.mxu0 0.0
        %543 = vmatprep.subr.mxu0 0.0
        %544 = vmatpush1.xpose.msra.mxu0 0.0
        %545 = vmatprep.subr.mxu0 0.0
        %546 = vmatpush1.xpose.msra.mxu0 0.0
        %547 = vmatprep.subr.mxu0 0.0
        %548 = vmatpush1.xpose.msra.mxu0 0.0
        %549 = vmatprep.subr.mxu0 0.0
        %550 = vmatpush1.xpose.msra.mxu0 0.0
        %551 = vmatprep.subr.mxu0 0.0
        %552 = vmatpush1.xpose.msra.mxu0 0.0
        %553 = vmatprep.subr.mxu0 0.0
        %554 = vmatpush1.xpose.msra.mxu0 0.0
        %555 = vmatprep.subr.mxu0 0.0
        %556 = vmatpush1.xpose.msra.mxu0 0.0
        %557 = vmatprep.subr.mxu0 0.0
        %558 = vmatpush1.xpose.msra.mxu0 0.0
        %559 = vmatprep.mubr.f32.mxu0 0.0
        %560 = vmatmul.mubr.f32.gmra.mrb[0].mxu0 %v491
        %v561 = vpop.f32.mrb[0].mxu0
        %v562 = vadd.f32 0.0, %v561
        %v563 = vpop.f32.mrb[0].mxu0
        %564 = vdwg.mxu0
        %565 = vrot.lane.b32.xlu0 %v409, 96
        %v566 = vpop.permute.xlu0 %565
        %v567 = vsel %vm414, %v409, 0
        %v569 = vsel %vm414, %v566, 0
        %571 = vmatprep.subr.mxu0 0.0
        %572 = vmatpush1.xpose.msra.mxu0 %v569
        %573 = vmatprep.subr.mxu0 0.0
        %574 = vmatpush1.xpose.msra.mxu0 0.0
        %575 = vmatprep.subr.mxu0 0.0
        %576 = vmatpush1.xpose.msra.mxu0 0.0
        %577 = vmatprep.subr.mxu0 0.0
        %578 = vmatpush1.xpose.msra.mxu0 0.0
        %579 = vmatprep.subr.mxu0 0.0
        %580 = vmatpush1.xpose.msra.mxu0 0.0
        %581 = vmatprep.subr.mxu0 0.0
        %582 = vmatpush1.xpose.msra.mxu0 0.0
        %583 = vmatprep.subr.mxu0 0.0
        %584 = vmatpush1.xpose.msra.mxu0 0.0
        %585 = vmatprep.subr.mxu0 0.0
        %586 = vmatpush1.xpose.msra.mxu0 0.0
        %587 = vmatprep.subr.mxu0 0.0
        %588 = vmatpush1.xpose.msra.mxu0 0.0
        %589 = vmatprep.subr.mxu0 0.0
        %590 = vmatpush1.xpose.msra.mxu0 0.0
        %591 = vmatprep.subr.mxu0 0.0
        %592 = vmatpush1.xpose.msra.mxu0 0.0
        %593 = vmatprep.subr.mxu0 0.0
        %594 = vmatpush1.xpose.msra.mxu0 0.0
        %595 = vmatprep.subr.mxu0 0.0
        %596 = vmatpush1.xpose.msra.mxu0 0.0
        %597 = vmatprep.subr.mxu0 0.0
        %598 = vmatpush1.xpose.msra.mxu0 0.0
        %599 = vmatprep.subr.mxu0 0.0
        %600 = vmatpush1.xpose.msra.mxu0 0.0
        %601 = vmatprep.subr.mxu0 0.0
        %602 = vmatpush1.xpose.msra.mxu0 0.0
        %603 = vmatprep.subr.mxu0 0.0
        %604 = vmatpush1.xpose.msra.mxu0 0.0
        %605 = vmatprep.subr.mxu0 0.0
        %606 = vmatpush1.xpose.msra.mxu0 0.0
        %607 = vmatprep.subr.mxu0 0.0
        %608 = vmatpush1.xpose.msra.mxu0 0.0
        %609 = vmatprep.subr.mxu0 0.0
        %610 = vmatpush1.xpose.msra.mxu0 0.0
        %611 = vmatprep.subr.mxu0 0.0
        %612 = vmatpush1.xpose.msra.mxu0 0.0
        %613 = vmatprep.subr.mxu0 0.0
        %614 = vmatpush1.xpose.msra.mxu0 0.0
        %615 = vmatprep.subr.mxu0 0.0
        %616 = vmatpush1.xpose.msra.mxu0 0.0
        %617 = vmatprep.subr.mxu0 0.0
        %618 = vmatpush1.xpose.msra.mxu0 0.0
        %619 = vmatprep.subr.mxu0 0.0
        %620 = vmatpush1.xpose.msra.mxu0 0.0
        %621 = vmatprep.subr.mxu0 0.0
        %622 = vmatpush1.xpose.msra.mxu0 0.0
        %623 = vmatprep.subr.mxu0 0.0
        %624 = vmatpush1.xpose.msra.mxu0 0.0
        %625 = vmatprep.subr.mxu0 0.0
        %626 = vmatpush1.xpose.msra.mxu0 0.0
        %627 = vmatprep.subr.mxu0 0.0
        %628 = vmatpush1.xpose.msra.mxu0 0.0
        %629 = vmatprep.subr.mxu0 0.0
        %630 = vmatpush1.xpose.msra.mxu0 0.0
        %631 = vmatprep.subr.mxu0 0.0
        %632 = vmatpush1.xpose.msra.mxu0 0.0
        %633 = vmatprep.subr.mxu0 0.0
        %634 = vmatpush1.xpose.msra.mxu0 0.0
        %635 = vmatprep.mubr.f32.mxu0 0.0
        %636 = vmatmul.mubr.f32.gmra.mrb[0].mxu0 %v567
        %v637 = vpop.f32.mrb[0].mxu0
        %v638 = vadd.f32 0.0, %v637
        %v639 = vpop.f32.mrb[0].mxu0
        %640 = vdwg.mxu0
        %641 = vrot.lane.b32.xlu0 %v411, 96
        %v642 = vpop.permute.xlu0 %641
        %v643 = vsel %vm414, %v411, 0
        %v645 = vsel %vm414, %v642, 0
        %647 = vmatprep.subr.mxu0 0.0
        %648 = vmatpush1.xpose.msra.mxu0 %v645
        %649 = vmatprep.subr.mxu0 0.0
        %650 = vmatpush1.xpose.msra.mxu0 0.0
        %651 = vmatprep.subr.mxu0 0.0
        %652 = vmatpush1.xpose.msra.mxu0 0.0
        %653 = vmatprep.subr.mxu0 0.0
        %654 = vmatpush1.xpose.msra.mxu0 0.0
        %655 = vmatprep.subr.mxu0 0.0
        %656 = vmatpush1.xpose.msra.mxu0 0.0
        %657 = vmatprep.subr.mxu0 0.0
        %658 = vmatpush1.xpose.msra.mxu0 0.0
        %659 = vmatprep.subr.mxu0 0.0
        %660 = vmatpush1.xpose.msra.mxu0 0.0
        %661 = vmatprep.subr.mxu0 0.0
        %662 = vmatpush1.xpose.msra.mxu0 0.0
        %663 = vmatprep.subr.mxu0 0.0
        %664 = vmatpush1.xpose.msra.mxu0 0.0
        %665 = vmatprep.subr.mxu0 0.0
        %666 = vmatpush1.xpose.msra.mxu0 0.0
        %667 = vmatprep.subr.mxu0 0.0
        %668 = vmatpush1.xpose.msra.mxu0 0.0
        %669 = vmatprep.subr.mxu0 0.0
        %670 = vmatpush1.xpose.msra.mxu0 0.0
        %671 = vmatprep.subr.mxu0 0.0
        %672 = vmatpush1.xpose.msra.mxu0 0.0
        %673 = vmatprep.subr.mxu0 0.0
        %674 = vmatpush1.xpose.msra.mxu0 0.0
        %675 = vmatprep.subr.mxu0 0.0
        %676 = vmatpush1.xpose.msra.mxu0 0.0
        %677 = vmatprep.subr.mxu0 0.0
        %678 = vmatpush1.xpose.msra.mxu0 0.0
        %679 = vmatprep.subr.mxu0 0.0
        %680 = vmatpush1.xpose.msra.mxu0 0.0
        %681 = vmatprep.subr.mxu0 0.0
        %682 = vmatpush1.xpose.msra.mxu0 0.0
        %683 = vmatprep.subr.mxu0 0.0
        %684 = vmatpush1.xpose.msra.mxu0 0.0
        %685 = vmatprep.subr.mxu0 0.0
        %686 = vmatpush1.xpose.msra.mxu0 0.0
        %687 = vmatprep.subr.mxu0 0.0
        %688 = vmatpush1.xpose.msra.mxu0 0.0
        %689 = vmatprep.subr.mxu0 0.0
        %690 = vmatpush1.xpose.msra.mxu0 0.0
        %691 = vmatprep.subr.mxu0 0.0
        %692 = vmatpush1.xpose.msra.mxu0 0.0
        %693 = vmatprep.subr.mxu0 0.0
        %694 = vmatpush1.xpose.msra.mxu0 0.0
        %695 = vmatprep.subr.mxu0 0.0
        %696 = vmatpush1.xpose.msra.mxu0 0.0
        %697 = vmatprep.subr.mxu0 0.0
        %698 = vmatpush1.xpose.msra.mxu0 0.0
        %699 = vmatprep.subr.mxu0 0.0
        %700 = vmatpush1.xpose.msra.mxu0 0.0
        %701 = vmatprep.subr.mxu0 0.0
        %702 = vmatpush1.xpose.msra.mxu0 0.0
        %703 = vmatprep.subr.mxu0 0.0
        %704 = vmatpush1.xpose.msra.mxu0 0.0
        %705 = vmatprep.subr.mxu0 0.0
        %706 = vmatpush1.xpose.msra.mxu0 0.0
        %707 = vmatprep.subr.mxu0 0.0
        %708 = vmatpush1.xpose.msra.mxu0 0.0
        %709 = vmatprep.subr.mxu0 0.0
        %710 = vmatpush1.xpose.msra.mxu0 0.0
        %711 = vmatprep.mubr.f32.mxu0 0.0
        %712 = vmatmul.mubr.f32.gmra.mrb[0].mxu0 %v643
        %v713 = vpop.f32.mrb[0].mxu0
        %v714 = vadd.f32 0.0, %v713
        %v715 = vpop.f32.mrb[0].mxu0
        %716 = vdwg.mxu0
        %v717 = vsel %vm414, %v486, -inf
        %718 = vmax.xlane.f32.xlu0 %v717
        %v719 = vpop.xlane.xlu0 %718
        %v720 = vsel %vm414, %v562, -inf
        %721 = vmax.xlane.f32.xlu0 %v720
        %v722 = vpop.xlane.xlu0 %721
        %v723 = vsel %vm414, %v638, -inf
        %724 = vmax.xlane.f32.xlu0 %v723
        %v725 = vpop.xlane.xlu0 %724
        %v726 = vsel %vm414, %v714, -inf
        %727 = vmax.xlane.f32.xlu0 %v726
        %v728 = vpop.xlane.xlu0 %727
        %v729 = vsub.f32 %v486, %v719
        %v730 = vsub.f32 %v562, %v722
        %v731 = vsub.f32 %v638, %v725
        %v732 = vsub.f32 %v714, %v728
        %v733 = vmul.f32 %v729, 1.442695
        %v734 = vpow.pop %v733
        %v735 = vmul.f32 %v730, 1.442695
        %v736 = vpow.pop %v735
        %v737 = vmul.f32 %v731, 1.442695
        %v738 = vpow.pop %v737
        %v739 = vmul.f32 %v732, 1.442695
        %v740 = vpow.pop %v739
        %v741 = vsel %vm414, %v734, 0.0
        %742 = vadd.xlane.f32.xlu0 %v741
        %v743 = vpop.xlane.xlu0 %742
        %v744 = vsel %vm414, %v736, 0.0
        %745 = vadd.xlane.f32.xlu0 %v744
        %v746 = vpop.xlane.xlu0 %745
        %v747 = vsel %vm414, %v738, 0.0
        %748 = vadd.xlane.f32.xlu0 %v747
        %v749 = vpop.xlane.xlu0 %748
        %v750 = vsel %vm414, %v740, 0.0
        %751 = vadd.xlane.f32.xlu0 %v750
        %v752 = vpop.xlane.xlu0 %751
        %v753 = vrcp.pop %v743
        %v754 = vmul.f32 %v734, %v753
        %v755 = vrcp.pop %v746
        %v756 = vmul.f32 %v736, %v755
        %v757 = vrcp.pop %v749
        %v758 = vmul.f32 %v738, %v757
        %v759 = vrcp.pop %v752
        %v760 = vmul.f32 %v740, %v759
        %761 = vrot.lane.b32.xlu0 %v402, 64
        %v762 = vpop.permute.xlu0 %761
        %v765 = vsel %vm414, %v754, 0
        %767 = vmatprep.subr.mxu0 0.0
        %768 = vmatpush1.msra.mxu0 %v762
        %769 = vmatprep.subr.mxu0 0.0
        %770 = vmatpush1.msra.mxu0 0.0
        %771 = vmatprep.subr.mxu0 0.0
        %772 = vmatpush1.msra.mxu0 0.0
        %773 = vmatprep.subr.mxu0 0.0
        %774 = vmatpush1.msra.mxu0 0.0
        %775 = vmatprep.subr.mxu0 0.0
        %776 = vmatpush1.msra.mxu0 0.0
        %777 = vmatprep.subr.mxu0 0.0
        %778 = vmatpush1.msra.mxu0 0.0
        %779 = vmatprep.subr.mxu0 0.0
        %780 = vmatpush1.msra.mxu0 0.0
        %781 = vmatprep.subr.mxu0 0.0
        %782 = vmatpush1.msra.mxu0 0.0
        %783 = vmatprep.subr.mxu0 0.0
        %784 = vmatpush1.msra.mxu0 0.0
        %785 = vmatprep.subr.mxu0 0.0
        %786 = vmatpush1.msra.mxu0 0.0
        %787 = vmatprep.subr.mxu0 0.0
        %788 = vmatpush1.msra.mxu0 0.0
        %789 = vmatprep.subr.mxu0 0.0
        %790 = vmatpush1.msra.mxu0 0.0
        %791 = vmatprep.subr.mxu0 0.0
        %792 = vmatpush1.msra.mxu0 0.0
        %793 = vmatprep.subr.mxu0 0.0
        %794 = vmatpush1.msra.mxu0 0.0
        %795 = vmatprep.subr.mxu0 0.0
        %796 = vmatpush1.msra.mxu0 0.0
        %797 = vmatprep.subr.mxu0 0.0
        %798 = vmatpush1.msra.mxu0 0.0
        %799 = vmatprep.subr.mxu0 0.0
        %800 = vmatpush1.msra.mxu0 0.0
        %801 = vmatprep.subr.mxu0 0.0
        %802 = vmatpush1.msra.mxu0 0.0
        %803 = vmatprep.subr.mxu0 0.0
        %804 = vmatpush1.msra.mxu0 0.0
        %805 = vmatprep.subr.mxu0 0.0
        %806 = vmatpush1.msra.mxu0 0.0
        %807 = vmatprep.subr.mxu0 0.0
        %808 = vmatpush1.msra.mxu0 0.0
        %809 = vmatprep.subr.mxu0 0.0
        %810 = vmatpush1.msra.mxu0 0.0
        %811 = vmatprep.subr.mxu0 0.0
        %812 = vmatpush1.msra.mxu0 0.0
        %813 = vmatprep.subr.mxu0 0.0
        %814 = vmatpush1.msra.mxu0 0.0
        %815 = vmatprep.subr.mxu0 0.0
        %816 = vmatpush1.msra.mxu0 0.0
        %817 = vmatprep.subr.mxu0 0.0
        %818 = vmatpush1.msra.mxu0 0.0
        %819 = vmatprep.subr.mxu0 0.0
        %820 = vmatpush1.msra.mxu0 0.0
        %821 = vmatprep.subr.mxu0 0.0
        %822 = vmatpush1.msra.mxu0 0.0
        %823 = vmatprep.subr.mxu0 0.0
        %824 = vmatpush1.msra.mxu0 0.0
        %825 = vmatprep.subr.mxu0 0.0
        %826 = vmatpush1.msra.mxu0 0.0
        %827 = vmatprep.subr.mxu0 0.0
        %828 = vmatpush1.msra.mxu0 0.0
        %829 = vmatprep.subr.mxu0 0.0
        %830 = vmatpush1.msra.mxu0 0.0
        %831 = vmatprep.mubr.f32.mxu0 0.0
        %832 = vmatmul.mubr.f32.gmra.mrb[0].mxu0 %v765
        %v833 = vpop.f32.mrb[0].mxu0
        %v834 = vadd.f32 0.0, %v833
        %v835 = vpop.f32.mrb[0].mxu0
        %836 = vdwg.mxu0
        %837 = vrot.lane.b32.xlu0 %v407, 64
        %v838 = vpop.permute.xlu0 %837
        %v841 = vsel %vm414, %v756, 0
        %843 = vmatprep.subr.mxu0 0.0
        %844 = vmatpush1.msra.mxu0 %v838
        %845 = vmatprep.subr.mxu0 0.0
        %846 = vmatpush1.msra.mxu0 0.0
        %847 = vmatprep.subr.mxu0 0.0
        %848 = vmatpush1.msra.mxu0 0.0
        %849 = vmatprep.subr.mxu0 0.0
        %850 = vmatpush1.msra.mxu0 0.0
        %851 = vmatprep.subr.mxu0 0.0
        %852 = vmatpush1.msra.mxu0 0.0
        %853 = vmatprep.subr.mxu0 0.0
        %854 = vmatpush1.msra.mxu0 0.0
        %855 = vmatprep.subr.mxu0 0.0
        %856 = vmatpush1.msra.mxu0 0.0
        %857 = vmatprep.subr.mxu0 0.0
        %858 = vmatpush1.msra.mxu0 0.0
        %859 = vmatprep.subr.mxu0 0.0
        %860 = vmatpush1.msra.mxu0 0.0
        %861 = vmatprep.subr.mxu0 0.0
        %862 = vmatpush1.msra.mxu0 0.0
        %863 = vmatprep.subr.mxu0 0.0
        %864 = vmatpush1.msra.mxu0 0.0
        %865 = vmatprep.subr.mxu0 0.0
        %866 = vmatpush1.msra.mxu0 0.0
        %867 = vmatprep.subr.mxu0 0.0
        %868 = vmatpush1.msra.mxu0 0.0
        %869 = vmatprep.subr.mxu0 0.0
        %870 = vmatpush1.msra.mxu0 0.0
        %871 = vmatprep.subr.mxu0 0.0
        %872 = vmatpush1.msra.mxu0 0.0
        %873 = vmatprep.subr.mxu0 0.0
        %874 = vmatpush1.msra.mxu0 0.0
        %875 = vmatprep.subr.mxu0 0.0
        %876 = vmatpush1.msra.mxu0 0.0
        %877 = vmatprep.subr.mxu0 0.0
        %878 = vmatpush1.msra.mxu0 0.0
        %879 = vmatprep.subr.mxu0 0.0
        %880 = vmatpush1.msra.mxu0 0.0
        %881 = vmatprep.subr.mxu0 0.0
        %882 = vmatpush1.msra.mxu0 0.0
        %883 = vmatprep.subr.mxu0 0.0
        %884 = vmatpush1.msra.mxu0 0.0
        %885 = vmatprep.subr.mxu0 0.0
        %886 = vmatpush1.msra.mxu0 0.0
        %887 = vmatprep.subr.mxu0 0.0
        %888 = vmatpush1.msra.mxu0 0.0
        %889 = vmatprep.subr.mxu0 0.0
        %890 = vmatpush1.msra.mxu0 0.0
        %891 = vmatprep.subr.mxu0 0.0
        %892 = vmatpush1.msra.mxu0 0.0
        %893 = vmatprep.subr.mxu0 0.0
        %894 = vmatpush1.msra.mxu0 0.0
        %895 = vmatprep.subr.mxu0 0.0
        %896 = vmatpush1.msra.mxu0 0.0
        %897 = vmatprep.subr.mxu0 0.0
        %898 = vmatpush1.msra.mxu0 0.0
        %899 = vmatprep.subr.mxu0 0.0
        %900 = vmatpush1.msra.mxu0 0.0
        %901 = vmatprep.subr.mxu0 0.0
        %902 = vmatpush1.msra.mxu0 0.0
        %903 = vmatprep.subr.mxu0 0.0
        %904 = vmatpush1.msra.mxu0 0.0
        %905 = vmatprep.subr.mxu0 0.0
        %906 = vmatpush1.msra.mxu0 0.0
        %907 = vmatprep.mubr.f32.mxu0 0.0
        %908 = vmatmul.mubr.f32.gmra.mrb[0].mxu0 %v841
        %v909 = vpop.f32.mrb[0].mxu0
        %v910 = vadd.f32 0.0, %v909
        %v911 = vpop.f32.mrb[0].mxu0
        %912 = vdwg.mxu0
        %913 = vrot.lane.b32.xlu0 %v409, 64
        %v914 = vpop.permute.xlu0 %913
        %v917 = vsel %vm414, %v758, 0
        %919 = vmatprep.subr.mxu0 0.0
        %920 = vmatpush1.msra.mxu0 %v914
        %921 = vmatprep.subr.mxu0 0.0
        %922 = vmatpush1.msra.mxu0 0.0
        %923 = vmatprep.subr.mxu0 0.0
        %924 = vmatpush1.msra.mxu0 0.0
        %925 = vmatprep.subr.mxu0 0.0
        %926 = vmatpush1.msra.mxu0 0.0
        %927 = vmatprep.subr.mxu0 0.0
        %928 = vmatpush1.msra.mxu0 0.0
        %929 = vmatprep.subr.mxu0 0.0
        %930 = vmatpush1.msra.mxu0 0.0
        %931 = vmatprep.subr.mxu0 0.0
        %932 = vmatpush1.msra.mxu0 0.0
        %933 = vmatprep.subr.mxu0 0.0
        %934 = vmatpush1.msra.mxu0 0.0
        %935 = vmatprep.subr.mxu0 0.0
        %936 = vmatpush1.msra.mxu0 0.0
        %937 = vmatprep.subr.mxu0 0.0
        %938 = vmatpush1.msra.mxu0 0.0
        %939 = vmatprep.subr.mxu0 0.0
        %940 = vmatpush1.msra.mxu0 0.0
        %941 = vmatprep.subr.mxu0 0.0
        %942 = vmatpush1.msra.mxu0 0.0
        %943 = vmatprep.subr.mxu0 0.0
        %944 = vmatpush1.msra.mxu0 0.0
        %945 = vmatprep.subr.mxu0 0.0
        %946 = vmatpush1.msra.mxu0 0.0
        %947 = vmatprep.subr.mxu0 0.0
        %948 = vmatpush1.msra.mxu0 0.0
        %949 = vmatprep.subr.mxu0 0.0
        %950 = vmatpush1.msra.mxu0 0.0
        %951 = vmatprep.subr.mxu0 0.0
        %952 = vmatpush1.msra.mxu0 0.0
        %953 = vmatprep.subr.mxu0 0.0
        %954 = vmatpush1.msra.mxu0 0.0
        %955 = vmatprep.subr.mxu0 0.0
        %956 = vmatpush1.msra.mxu0 0.0
        %957 = vmatprep.subr.mxu0 0.0
        %958 = vmatpush1.msra.mxu0 0.0
        %959 = vmatprep.subr.mxu0 0.0
        %960 = vmatpush1.msra.mxu0 0.0
        %961 = vmatprep.subr.mxu0 0.0
        %962 = vmatpush1.msra.mxu0 0.0
        %963 = vmatprep.subr.mxu0 0.0
        %964 = vmatpush1.msra.mxu0 0.0
        %965 = vmatprep.subr.mxu0 0.0
        %966 = vmatpush1.msra.mxu0 0.0
        %967 = vmatprep.subr.mxu0 0.0
        %968 = vmatpush1.msra.mxu0 0.0
        %969 = vmatprep.subr.mxu0 0.0
        %970 = vmatpush1.msra.mxu0 0.0
        %971 = vmatprep.subr.mxu0 0.0
        %972 = vmatpush1.msra.mxu0 0.0
        %973 = vmatprep.subr.mxu0 0.0
        %974 = vmatpush1.msra.mxu0 0.0
        %975 = vmatprep.subr.mxu0 0.0
        %976 = vmatpush1.msra.mxu0 0.0
        %977 = vmatprep.subr.mxu0 0.0
        %978 = vmatpush1.msra.mxu0 0.0
        %979 = vmatprep.subr.mxu0 0.0
        %980 = vmatpush1.msra.mxu0 0.0
        %981 = vmatprep.subr.mxu0 0.0
        %982 = vmatpush1.msra.mxu0 0.0
        %983 = vmatprep.mubr.f32.mxu0 0.0
        %984 = vmatmul.mubr.f32.gmra.mrb[0].mxu0 %v917
        %v985 = vpop.f32.mrb[0].mxu0
        %v986 = vadd.f32 0.0, %v985
        %v987 = vpop.f32.mrb[0].mxu0
        %988 = vdwg.mxu0
        %989 = vrot.lane.b32.xlu0 %v411, 64
        %v990 = vpop.permute.xlu0 %989
        %v993 = vsel %vm414, %v760, 0
        %995 = vmatprep.subr.mxu0 0.0
        %996 = vmatpush1.msra.mxu0 %v990
        %997 = vmatprep.subr.mxu0 0.0
        %998 = vmatpush1.msra.mxu0 0.0
        %999 = vmatprep.subr.mxu0 0.0
        %1000 = vmatpush1.msra.mxu0 0.0
        %1001 = vmatprep.subr.mxu0 0.0
        %1002 = vmatpush1.msra.mxu0 0.0
        %1003 = vmatprep.subr.mxu0 0.0
        %1004 = vmatpush1.msra.mxu0 0.0
        %1005 = vmatprep.subr.mxu0 0.0
        %1006 = vmatpush1.msra.mxu0 0.0
        %1007 = vmatprep.subr.mxu0 0.0
        %1008 = vmatpush1.msra.mxu0 0.0
        %1009 = vmatprep.subr.mxu0 0.0
        %1010 = vmatpush1.msra.mxu0 0.0
        %1011 = vmatprep.subr.mxu0 0.0
        %1012 = vmatpush1.msra.mxu0 0.0
        %1013 = vmatprep.subr.mxu0 0.0
        %1014 = vmatpush1.msra.mxu0 0.0
        %1015 = vmatprep.subr.mxu0 0.0
        %1016 = vmatpush1.msra.mxu0 0.0
        %1017 = vmatprep.subr.mxu0 0.0
        %1018 = vmatpush1.msra.mxu0 0.0
        %1019 = vmatprep.subr.mxu0 0.0
        %1020 = vmatpush1.msra.mxu0 0.0
        %1021 = vmatprep.subr.mxu0 0.0
        %1022 = vmatpush1.msra.mxu0 0.0
        %1023 = vmatprep.subr.mxu0 0.0
        %1024 = vmatpush1.msra.mxu0 0.0
        %1025 = vmatprep.subr.mxu0 0.0
        %1026 = vmatpush1.msra.mxu0 0.0
        %1027 = vmatprep.subr.mxu0 0.0
        %1028 = vmatpush1.msra.mxu0 0.0
        %1029 = vmatprep.subr.mxu0 0.0
        %1030 = vmatpush1.msra.mxu0 0.0
        %1031 = vmatprep.subr.mxu0 0.0
        %1032 = vmatpush1.msra.mxu0 0.0
        %1033 = vmatprep.subr.mxu0 0.0
        %1034 = vmatpush1.msra.mxu0 0.0
        %1035 = vmatprep.subr.mxu0 0.0
        %1036 = vmatpush1.msra.mxu0 0.0
        %1037 = vmatprep.subr.mxu0 0.0
        %1038 = vmatpush1.msra.mxu0 0.0
        %1039 = vmatprep.subr.mxu0 0.0
        %1040 = vmatpush1.msra.mxu0 0.0
        %1041 = vmatprep.subr.mxu0 0.0
        %1042 = vmatpush1.msra.mxu0 0.0
        %1043 = vmatprep.subr.mxu0 0.0
        %1044 = vmatpush1.msra.mxu0 0.0
        %1045 = vmatprep.subr.mxu0 0.0
        %1046 = vmatpush1.msra.mxu0 0.0
        %1047 = vmatprep.subr.mxu0 0.0
        %1048 = vmatpush1.msra.mxu0 0.0
        %1049 = vmatprep.subr.mxu0 0.0
        %1050 = vmatpush1.msra.mxu0 0.0
        %1051 = vmatprep.subr.mxu0 0.0
        %1052 = vmatpush1.msra.mxu0 0.0
        %1053 = vmatprep.subr.mxu0 0.0
        %1054 = vmatpush1.msra.mxu0 0.0
        %1055 = vmatprep.subr.mxu0 0.0
        %1056 = vmatpush1.msra.mxu0 0.0
        %1057 = vmatprep.subr.mxu0 0.0
        %1058 = vmatpush1.msra.mxu0 0.0
        %1059 = vmatprep.mubr.f32.mxu0 0.0
        %1060 = vmatmul.mubr.f32.gmra.mrb[0].mxu0 %v993
        %v1061 = vpop.f32.mrb[0].mxu0
        %v1062 = vadd.f32 0.0, %v1061
        %v1063 = vpop.f32.mrb[0].mxu0
        %1064 = vdwg.mxu0
        %1066 = vrot.lane.b32.xlu0 %v910, 8
        %v1067 = vpop.permute.xlu0 %1066
        %1070 = vrot.lane.b32.xlu0 %v986, 16
        %v1071 = vpop.permute.xlu0 %1070
        %1074 = vrot.lane.b32.xlu0 %v1062, 24
        %v1075 = vpop.permute.xlu0 %1074
        %v1077 = vsel %vm414, %v834, %v1067
        %vm1078 = vcmask 130048
        %v1079 = vsel %vm1078, %v1077, %v1071
        %vm1080 = vcmask 195584
        %v1081 = vsel %vm1080, %v1079, %v1075
        %v1082 = vld [vmem:[#allocation7] sm:$0xff]
        %v1083 = vld [vmem:[#allocation7 + $0x8] sm:$0xff]
        %v1084 = vld [vmem:[#allocation7 + $0x10] sm:$0xff]
        %v1085 = vld [vmem:[#allocation7 + $0x18] sm:$0xff]
        %v1086 = vld [vmem:[%s5] sm:$0x1]
        %v1088 = vlaneseq
        %v1089 = vshrl.u32 %v1088, 7
        %v1090 = vsub.s32 0, %v1089
        %v1091 = vrot.slane %v1086, %v1090
        %v1094 = vsel %vm299, %v1081, 0
        %1096 = vmatprep.subr.mxu0 0.0
        %1097 = vmatpush1.msra.mxu0 %v1082
        %1098 = vmatprep.subr.mxu0 0.0
        %1099 = vmatpush1.msra.mxu0 %v1083
        %1100 = vmatprep.subr.mxu0 0.0
        %1101 = vmatpush1.msra.mxu0 %v1084
        %1102 = vmatprep.subr.mxu0 0.0
        %1103 = vmatpush1.msra.mxu0 %v1085
        %1104 = vmatprep.subr.mxu0 0.0
        %1105 = vmatpush1.msra.mxu0 0.0
        %1106 = vmatprep.subr.mxu0 0.0
        %1107 = vmatpush1.msra.mxu0 0.0
        %1108 = vmatprep.subr.mxu0 0.0
        %1109 = vmatpush1.msra.mxu0 0.0
        %1110 = vmatprep.subr.mxu0 0.0
        %1111 = vmatpush1.msra.mxu0 0.0
        %1112 = vmatprep.subr.mxu0 0.0
        %1113 = vmatpush1.msra.mxu0 0.0
        %1114 = vmatprep.subr.mxu0 0.0
        %1115 = vmatpush1.msra.mxu0 0.0
        %1116 = vmatprep.subr.mxu0 0.0
        %1117 = vmatpush1.msra.mxu0 0.0
        %1118 = vmatprep.subr.mxu0 0.0
        %1119 = vmatpush1.msra.mxu0 0.0
        %1120 = vmatprep.subr.mxu0 0.0
        %1121 = vmatpush1.msra.mxu0 0.0
        %1122 = vmatprep.subr.mxu0 0.0
        %1123 = vmatpush1.msra.mxu0 0.0
        %1124 = vmatprep.subr.mxu0 0.0
        %1125 = vmatpush1.msra.mxu0 0.0
        %1126 = vmatprep.subr.mxu0 0.0
        %1127 = vmatpush1.msra.mxu0 0.0
        %1128 = vmatprep.subr.mxu0 0.0
        %1129 = vmatpush1.msra.mxu0 0.0
        %1130 = vmatprep.subr.mxu0 0.0
        %1131 = vmatpush1.msra.mxu0 0.0
        %1132 = vmatprep.subr.mxu0 0.0
        %1133 = vmatpush1.msra.mxu0 0.0
        %1134 = vmatprep.subr.mxu0 0.0
        %1135 = vmatpush1.msra.mxu0 0.0
        %1136 = vmatprep.subr.mxu0 0.0
        %1137 = vmatpush1.msra.mxu0 0.0
        %1138 = vmatprep.subr.mxu0 0.0
        %1139 = vmatpush1.msra.mxu0 0.0
        %1140 = vmatprep.subr.mxu0 0.0
        %1141 = vmatpush1.msra.mxu0 0.0
        %1142 = vmatprep.subr.mxu0 0.0
        %1143 = vmatpush1.msra.mxu0 0.0
        %1144 = vmatprep.subr.mxu0 0.0
        %1145 = vmatpush1.msra.mxu0 0.0
        %1146 = vmatprep.subr.mxu0 0.0
        %1147 = vmatpush1.msra.mxu0 0.0
        %1148 = vmatprep.subr.mxu0 0.0
        %1149 = vmatpush1.msra.mxu0 0.0
        %1150 = vmatprep.subr.mxu0 0.0
        %1151 = vmatpush1.msra.mxu0 0.0
        %1152 = vmatprep.subr.mxu0 0.0
        %1153 = vmatpush1.msra.mxu0 0.0
        %1154 = vmatprep.subr.mxu0 0.0
        %1155 = vmatpush1.msra.mxu0 0.0
        %1156 = vmatprep.subr.mxu0 0.0
        %1157 = vmatpush1.msra.mxu0 0.0
        %1158 = vmatprep.subr.mxu0 0.0
        %1159 = vmatpush1.msra.mxu0 0.0
        %1160 = vmatprep.mubr.f32.mxu0 0.0
        %1161 = vmatmul.mubr.f32.gmra.mrb[0].mxu0 %v1094
        %v1162 = vpop.f32.mrb[0].mxu0
        %v1163 = vadd.f32 %v1091, %v1162
        %v1164 = vpop.f32.mrb[0].mxu0
        %1165 = vdwg.mxu0
        %v1166 = vadd.f32 %v296, %v1163
        %1167 = vst.msk [vmem:[%s295] sm:$0xff] %vm299, %v1166
        %s1168 = sand.u32 %s163, 1
        %s1169 = scalar_lea.sflag [#allocation4], %s1168
        %s1170 = sand.u32 %s163, 1
        %s1171 = smul.addr %s1170, 8
        %s1172 = scalar_lea.vmem [#allocation8], %s1171
        // Predicated region
        $region57: #{tpu_custom_call.1} parent=43 // pred_check
          %p1173 = pneg %p173
        $region58: #{tpu_custom_call.1} parent=43 // pred_check_branch
          %1175 = sbr.rel (%p1173) target = $region60
        $region59: #{tpu_custom_call.1} parent=43 // pred_region
          %s1177 = ssub.s32 128, 128
          %1178 = vsyncadd %s1169, %s1177
          %s1179 = smul.addr %s24, 128
          %s1180 = scalar_lea.hbm %s6, %s1179
          %s1182 = sshll.u32 %s1172, 4
          %s1183 = int_to_ptr.vmem [resolvable:$true] %s1182
          %1185 = dma.vmem_to_hbm [thread:$0]  %s1183, 128, %s1180, %s1169
        $region60: #{tpu_custom_call.1} parent=43 // pred_fallthru
          _
      $region44: #{tpu_custom_call.1} parent=5 // pred_fallthru
        _
      %p1186 = scmp.le.s32.totalorder 2, %s19
      // Predicated region
      $region61: #{tpu_custom_call.1} parent=5 // pred_check
        %p1187 = pneg %p1186
      $region62: #{tpu_custom_call.1} parent=5 // pred_check_branch
        %1189 = sbr.rel (%p1187) target = $region64
      $region63: #{tpu_custom_call.1} parent=5 // pred_region
        %s1190 = ssub.s32 %s19, 2
        // Predicated region
        $region65: #{tpu_custom_call.1} parent=63 // pred_check
          %p1191 = pneg %p179
        $region66: #{tpu_custom_call.1} parent=63 // pred_check_branch
          %1193 = sbr.rel (%p1191) target = $region68
        $region67: #{tpu_custom_call.1} parent=63 // pred_region
          %s1194 = sand.u32 %s164, 1
          %s1195 = scalar_lea.sflag [#allocation4], %s1194
          %s1196 = sand.u32 %s164, 1
          %s1197 = smul.addr %s1196, 8
          %s1198 = scalar_lea.vmem [#allocation8], %s1197
          %1199 = dma.done %s1195, 128
        $region68: #{tpu_custom_call.1} parent=63 // pred_fallthru
          _
      $region64: #{tpu_custom_call.1} parent=5 // pred_fallthru
        _
    $region6: #{tpu_custom_call.1} parent=1 // loop_footer
      %s23 = sadd.s32 1, %s19
    $region7: #{tpu_custom_call.1} parent=1 // loop_footer_branch
      %18 = sbr.rel target = $region3
    $region8: #{tpu_custom_call.1} parent=1 // loop_exit
      _
    %1200 = vsyncpa [#allocation3], 1
    %s1201 = scalar_lea.sflag [#allocation3], 1
    %1202 = vsyncpa %s1201, 1
    %1203 = vsyncpa [#allocation6], 1
    %1204 = vsyncpa [#allocation4], 1
    %s1205 = scalar_lea.sflag [#allocation4], 1
    %1206 = vsyncpa %s1205, 1

</llo_original>
